<compile_context>
chip_gen: v5e
topology: v5e:2x2
jax: 0.10.0
libtpu: 0.0.40
codegen_flags: <defaults>
</compile_context>

<pallas_src>
import numpy as np
import jax
import jax.numpy as jnp
from jax.experimental import pallas as pl
from jax.experimental.pallas import tpu as pltpu


def down_kernel(x_ref, w1_ref, g1_ref, be1_ref, w2_ref, g2_ref, be2_ref,
                o_ref, xpad_ref, hpad_ref, p1_ref, p2_ref,
                *, compute_dtype=jnp.float32):
    """x_ref : (4*N, H, W, Cin)  -- the four 2x2 maxpool phases stacked on the lead axis.
       w*_ref: (9*Cin_l, Cout_l) -- fused im2col conv weights; g*/be*: (1, C) BN gamma/beta.
       o_ref : (N*H*W, Cout)     -- output slab (wrapper reshapes back to NCHW).
       xpad/hpad: (N, H+2, W+2, C) zero-halo padded activations (VMEM scratch).
       p1/p2 : (N*H*W, 9*C) im2col patch slabs (VMEM scratch)."""
    fourN, H, W, Cin = x_ref.shape
    N = fourN // 4
    Cmid = w1_ref.shape[1]
    M = N * H * W
    eps = 1e-5

    # ---- MaxPool2d(2): elementwise max over the four pooling phases ----
    p00 = x_ref[pl.ds(0 * N, N), :, :, :]
    p01 = x_ref[pl.ds(1 * N, N), :, :, :]
    p10 = x_ref[pl.ds(2 * N, N), :, :, :]
    p11 = x_ref[pl.ds(3 * N, N), :, :, :]
    xpool = jnp.maximum(jnp.maximum(p00, p01), jnp.maximum(p10, p11))  # (N, H, W, Cin)

    def pad_store(dst_ref, interior, c):
        # Zero only the 1-pixel halo strips (not the whole scratch), then write interior.
        zrow = jnp.zeros((N, 1, W + 2, c), jnp.float32)
        zcol = jnp.zeros((N, H, 1, c), jnp.float32)
        dst_ref[:, pl.ds(0, 1), :, :] = zrow
        dst_ref[:, pl.ds(H + 1, 1), :, :] = zrow
        dst_ref[:, pl.ds(1, H), pl.ds(0, 1), :] = zcol
        dst_ref[:, pl.ds(1, H), pl.ds(W + 1, 1), :] = zcol
        dst_ref[:, pl.ds(1, H), pl.ds(1, W), :] = interior

    def conv3x3(src_ref, patch_ref, w_ref, cin):
        # im2col: build the (M, 9*cin) patch slab once, then ONE fused MXU matmul
        # (contraction K = 9*cin instead of nine separate K=cin dots per image).
        for k in range(9):
            dy, dx = k // 3, k % 3
            tap = src_ref[:, pl.ds(dy, H), pl.ds(dx, W), :].reshape(M, cin)
            patch_ref[:, pl.ds(k * cin, cin)] = tap
        return jnp.dot(patch_ref[...].astype(compute_dtype),
                       w_ref[...].astype(compute_dtype),
                       preferred_element_type=jnp.float32)

    def bn_relu(y, g_ref, be_ref):
        # PyTorch BatchNorm2d in training mode: per-channel batch stats, biased variance.
        # Center once, reuse the centered tensor for both variance and normalization;
        # fold gamma into the rsqrt at per-channel (1, C) level so the full-tensor path
        # is a single multiply-add.
        m = jnp.mean(y, axis=0, keepdims=True)                       # (1, C)
        yc = y - m                                                    # reused
        v = jnp.mean(yc * yc, axis=0, keepdims=True)                  # (1, C)
        scale = g_ref[...] * jax.lax.rsqrt(v + eps)                   # (1, C), EUP rsqrt
        return jnp.maximum(yc * scale + be_ref[...], 0.0)

    # Conv biases are omitted on purpose: train-mode BN subtracts the per-channel batch
    # mean, so a per-channel constant bias cancels exactly (numerically identical result).
    pad_store(xpad_ref, xpool, Cin)
    h1 = bn_relu(conv3x3(xpad_ref, p1_ref, w1_ref, Cin), g1_ref, be1_ref)

    pad_store(hpad_ref, h1.reshape(N, H, W, Cmid), Cmid)
    h2 = bn_relu(conv3x3(hpad_ref, p2_ref, w2_ref, Cmid), g2_ref, be2_ref)

    o_ref[...] = h2.astype(o_ref.dtype)


def down_forward(x_nchw, params, *, compute_dtype=jnp.float32):
    """x_nchw: (N, Cin, Hin, Win) with even Hin/Win. Returns (N, Cout, Hin//2, Win//2)."""
    w1, b1, g1, be1, w2, b2, g2, be2 = params
    del b1, b2  # conv biases cancel exactly under training-mode BatchNorm
    N, Cin, Hin, Win = x_nchw.shape
    H, W = Hin // 2, Win // 2
    Cmid = w1.shape[3]
    Cout = w2.shape[3]
    M = N * H * W

    # NCHW -> NHWC, then expose the 2x2 pooling window as four stacked phase images:
    # (N,Hin,Win,C) -> (N,H,2,W,2,C) -> (2,2,N,H,W,C) -> (4*N,H,W,C).
    x = jnp.transpose(x_nchw, (0, 2, 3, 1))
    x = x.reshape(N, H, 2, W, 2, Cin).transpose(2, 4, 0, 1, 3, 5).reshape(4 * N, H, W, Cin)

    # Fuse the 3x3 taps into the contraction dim once, in the wrapper: (3,3,Ci,Co)->(9*Ci,Co).
    w1f = w1.reshape(9 * Cin, Cmid)
    w2f = w2.reshape(9 * Cmid, Cout)

    def full_spec(shape):
        n = len(shape)
        return pl.BlockSpec(shape, lambda i, _n=n: (0,) * _n)

    def kernel(*refs):
        down_kernel(*refs, compute_dtype=compute_dtype)

    out = pl.pallas_call(
        kernel,
        out_shape=jax.ShapeDtypeStruct((M, Cout), jnp.float32),
        grid_spec=pltpu.PrefetchScalarGridSpec(
            num_scalar_prefetch=0,
            grid=(1,),
            in_specs=[full_spec(x.shape),
                      full_spec(w1f.shape), full_spec((1, Cmid)), full_spec((1, Cmid)),
                      full_spec(w2f.shape), full_spec((1, Cout)), full_spec((1, Cout))],
            out_specs=full_spec((M, Cout)),
            scratch_shapes=[
                pltpu.VMEM((N, H + 2, W + 2, Cin), jnp.float32),   # padded pooled input
                pltpu.VMEM((N, H + 2, W + 2, Cmid), jnp.float32),  # padded mid activation
                pltpu.VMEM((M, 9 * Cin), jnp.float32),             # im2col slab, conv1
                pltpu.VMEM((M, 9 * Cmid), jnp.float32),            # im2col slab, conv2
            ],
        ),
        compiler_params=pltpu.CompilerParams(
            dimension_semantics=("arbitrary",),
            vmem_limit_bytes=32 * 1024 * 1024,
        ),
    )(x, w1f, g1.reshape(1, -1), be1.reshape(1, -1),
      w2f, g2.reshape(1, -1), be2.reshape(1, -1))

    # (N*H*W, Cout) slab -> NCHW
    return jnp.transpose(out.reshape(N, H, W, Cout), (0, 3, 1, 2))


def _reference(x_nchw, params):
    """Pure-JAX reference mirroring the PyTorch Down forward (maxpool + double conv,
    training-mode BatchNorm, conv biases included)."""
    w1, b1, g1, be1, w2, b2, g2, be2 = params
    eps = 1e-5
    N, C, Hin, Win = x_nchw.shape

    xp = jnp.max(x_nchw.reshape(N, C, Hin // 2, 2, Win // 2, 2), axis=(3, 5))  # MaxPool2d(2)

    def conv(x, w, b):
        y = jax.lax.conv_general_dilated(
            x, w, window_strides=(1, 1), padding=((1, 1), (1, 1)),
            dimension_numbers=('NCHW', 'HWIO', 'NCHW'))
        return y + b[None, :, None, None]

    def bn_relu(y, g, be):
        m = jnp.mean(y, axis=(0, 2, 3), keepdims=True)
        v = jnp.mean((y - m) ** 2, axis=(0, 2, 3), keepdims=True)
        h = (y - m) / jnp.sqrt(v + eps) * g[None, :, None, None] + be[None, :, None, None]
        return jnp.maximum(h, 0.0)

    h = bn_relu(conv(xp, w1, b1), g1, be1)
    return bn_relu(conv(h, w2, b2), g2, be2)


if __name__ == "__main__":
    N, Cin, Hin, Win = 2, 4, 16, 16
    Cout = 16
    Cmid = Cout  # mid_channels defaults to out_channels

    key = jax.random.PRNGKey(0)
    ks = jax.random.split(key, 9)
    x = jax.random.normal(ks[0], (N, Cin, Hin, Win), jnp.float32)

    params = (
        0.1 * jax.random.normal(ks[1], (3, 3, Cin, Cmid), jnp.float32),   # conv1 weight (HWIO)
        0.1 * jax.random.normal(ks[2], (Cmid,), jnp.float32),             # conv1 bias
        1.0 + 0.1 * jax.random.normal(ks[3], (Cmid,), jnp.float32),       # bn1 gamma
        0.1 * jax.random.normal(ks[4], (Cmid,), jnp.float32),             # bn1 beta
        0.1 * jax.random.normal(ks[5], (3, 3, Cmid, Cout), jnp.float32),  # conv2 weight (HWIO)
        0.1 * jax.random.normal(ks[6], (Cout,), jnp.float32),             # conv2 bias
        1.0 + 0.1 * jax.random.normal(ks[7], (Cout,), jnp.float32),       # bn2 gamma
        0.1 * jax.random.normal(ks[8], (Cout,), jnp.float32),             # bn2 beta
    )

    out = jax.block_until_ready(down_forward(x, params))
    ref = jax.block_until_ready(_reference(x, params))

    assert out.shape == (N, Cout, Hin // 2, Win // 2)
    np.testing.assert_allclose(np.asarray(out), np.asarray(ref), rtol=1e-4, atol=1e-4)

    print("KERNEL_OK")
</pallas_src>

<mosaic_0001>
module attributes {stable_mosaic.version = 11 : i64} {
  func.func @kernel(%arg0: i32, %arg1: memref<8x8x8x4xf32, #tpu.memory_space<vmem>>, %arg2: memref<36x16xf32, #tpu.memory_space<vmem>>, %arg3: memref<1x16xf32, #tpu.memory_space<vmem>>, %arg4: memref<1x16xf32, #tpu.memory_space<vmem>>, %arg5: memref<144x16xf32, #tpu.memory_space<vmem>>, %arg6: memref<1x16xf32, #tpu.memory_space<vmem>>, %arg7: memref<1x16xf32, #tpu.memory_space<vmem>>, %arg8: memref<128x16xf32, #tpu.memory_space<vmem>>, %arg9: memref<2x10x10x4xf32, #tpu.memory_space<vmem>>, %arg10: memref<2x10x10x16xf32, #tpu.memory_space<vmem>>, %arg11: memref<128x36xf32, #tpu.memory_space<vmem>>, %arg12: memref<128x144xf32, #tpu.memory_space<vmem>>) attributes {dimension_semantics = [#tpu.dimension_semantics<arbitrary>], iteration_bounds = array<i64: 1>, scalar_prefetch = 0 : i64, scratch_operands = 4 : i64, tpu.core_type = #tpu.core_type<tc>, window_params = [{pipeline_mode = #tpu.pipeline_mode<synchronous>, transform_indices = @transform_0, window_bounds = array<i64: 8, 8, 8, 4>}, {pipeline_mode = #tpu.pipeline_mode<synchronous>, transform_indices = @transform_1, window_bounds = array<i64: 36, 16>}, {pipeline_mode = #tpu.pipeline_mode<synchronous>, transform_indices = @transform_2, window_bounds = array<i64: 1, 16>}, {pipeline_mode = #tpu.pipeline_mode<synchronous>, transform_indices = @transform_3, window_bounds = array<i64: 1, 16>}, {pipeline_mode = #tpu.pipeline_mode<synchronous>, transform_indices = @transform_4, window_bounds = array<i64: 144, 16>}, {pipeline_mode = #tpu.pipeline_mode<synchronous>, transform_indices = @transform_5, window_bounds = array<i64: 1, 16>}, {pipeline_mode = #tpu.pipeline_mode<synchronous>, transform_indices = @transform_6, window_bounds = array<i64: 1, 16>}, {pipeline_mode = #tpu.pipeline_mode<synchronous>, transform_indices = @transform_7, window_bounds = array<i64: 128, 16>}]} {
    %c0 = arith.constant 0 : index
    %c0_0 = arith.constant 0 : index
    %c0_1 = arith.constant 0 : index
    %c0_2 = arith.constant 0 : index
    %0 = vector.load %arg1[%c0, %c0_0, %c0_1, %c0_2] : memref<8x8x8x4xf32, #tpu.memory_space<vmem>>, vector<2x8x8x4xf32>
    %c2 = arith.constant 2 : index
    %c0_3 = arith.constant 0 : index
    %c0_4 = arith.constant 0 : index
    %c0_5 = arith.constant 0 : index
    %1 = vector.load %arg1[%c2, %c0_3, %c0_4, %c0_5] : memref<8x8x8x4xf32, #tpu.memory_space<vmem>>, vector<2x8x8x4xf32>
    %c4 = arith.constant 4 : index
    %c0_6 = arith.constant 0 : index
    %c0_7 = arith.constant 0 : index
    %c0_8 = arith.constant 0 : index
    %2 = vector.load %arg1[%c4, %c0_6, %c0_7, %c0_8] : memref<8x8x8x4xf32, #tpu.memory_space<vmem>>, vector<2x8x8x4xf32>
    %c6 = arith.constant 6 : index
    %c0_9 = arith.constant 0 : index
    %c0_10 = arith.constant 0 : index
    %c0_11 = arith.constant 0 : index
    %3 = vector.load %arg1[%c6, %c0_9, %c0_10, %c0_11] : memref<8x8x8x4xf32, #tpu.memory_space<vmem>>, vector<2x8x8x4xf32>
    %4 = arith.maximumf %0, %1 : vector<2x8x8x4xf32>
    %5 = arith.maximumf %2, %3 : vector<2x8x8x4xf32>
    %6 = arith.maximumf %4, %5 : vector<2x8x8x4xf32>
    %cst = arith.constant 0.000000e+00 : f32
    %7 = vector.broadcast %cst : f32 to vector<2x1x10x4xf32>
    %cst_12 = arith.constant 0.000000e+00 : f32
    %8 = vector.broadcast %cst_12 : f32 to vector<2x8x1x4xf32>
    %c0_13 = arith.constant 0 : index
    %c0_14 = arith.constant 0 : index
    %c0_15 = arith.constant 0 : index
    %c0_16 = arith.constant 0 : index
    %9 = vector.load %arg9[%c0_13, %c0_14, %c0_15, %c0_16] : memref<2x10x10x4xf32, #tpu.memory_space<vmem>>, vector<2x1x10x4xf32>
    tpu.vector_store %arg9[%c0_13, %c0_14, %c0_15, %c0_16], %7 {strides = array<i32>} : memref<2x10x10x4xf32, #tpu.memory_space<vmem>>, vector<2x1x10x4xf32>,
    %c0_17 = arith.constant 0 : index
    %c9 = arith.constant 9 : index
    %c0_18 = arith.constant 0 : index
    %c0_19 = arith.constant 0 : index
    %10 = vector.load %arg9[%c0_17, %c9, %c0_18, %c0_19] : memref<2x10x10x4xf32, #tpu.memory_space<vmem>>, vector<2x1x10x4xf32>
    tpu.vector_store %arg9[%c0_17, %c9, %c0_18, %c0_19], %7 {strides = array<i32>} : memref<2x10x10x4xf32, #tpu.memory_space<vmem>>, vector<2x1x10x4xf32>,
    %c0_20 = arith.constant 0 : index
    %c1 = arith.constant 1 : index
    %c0_21 = arith.constant 0 : index
    %c0_22 = arith.constant 0 : index
    %11 = vector.load %arg9[%c0_20, %c1, %c0_21, %c0_22] : memref<2x10x10x4xf32, #tpu.memory_space<vmem>>, vector<2x8x1x4xf32>
    tpu.vector_store %arg9[%c0_20, %c1, %c0_21, %c0_22], %8 {strides = array<i32>} : memref<2x10x10x4xf32, #tpu.memory_space<vmem>>, vector<2x8x1x4xf32>,
    %c0_23 = arith.constant 0 : index
    %c1_24 = arith.constant 1 : index
    %c9_25 = arith.constant 9 : index
    %c0_26 = arith.constant 0 : index
    %12 = vector.load %arg9[%c0_23, %c1_24, %c9_25, %c0_26] : memref<2x10x10x4xf32, #tpu.memory_space<vmem>>, vector<2x8x1x4xf32>
    tpu.vector_store %arg9[%c0_23, %c1_24, %c9_25, %c0_26], %8 {strides = array<i32>} : memref<2x10x10x4xf32, #tpu.memory_space<vmem>>, vector<2x8x1x4xf32>,
    %c0_27 = arith.constant 0 : index
    %c1_28 = arith.constant 1 : index
    %c1_29 = arith.constant 1 : index
    %c0_30 = arith.constant 0 : index
    %13 = vector.load %arg9[%c0_27, %c1_28, %c1_29, %c0_30] : memref<2x10x10x4xf32, #tpu.memory_space<vmem>>, vector<2x8x8x4xf32>
    tpu.vector_store %arg9[%c0_27, %c1_28, %c1_29, %c0_30], %6 {strides = array<i32>} : memref<2x10x10x4xf32, #tpu.memory_space<vmem>>, vector<2x8x8x4xf32>,
    %c0_31 = arith.constant 0 : index
    %c0_32 = arith.constant 0 : index
    %c0_33 = arith.constant 0 : index
    %c0_34 = arith.constant 0 : index
    %14 = vector.load %arg9[%c0_31, %c0_32, %c0_33, %c0_34] : memref<2x10x10x4xf32, #tpu.memory_space<vmem>>, vector<2x8x8x4xf32>
    %15 = vector.shape_cast %14 : vector<2x8x8x4xf32> to vector<128x4xf32>
    %c0_35 = arith.constant 0 : index
    %c0_36 = arith.constant 0 : index
    %16 = vector.load %arg11[%c0_35, %c0_36] : memref<128x36xf32, #tpu.memory_space<vmem>>, vector<128x4xf32>
    tpu.vector_store %arg11[%c0_35, %c0_36], %15 {strides = array<i32>} : memref<128x36xf32, #tpu.memory_space<vmem>>, vector<128x4xf32>,
    %c0_37 = arith.constant 0 : index
    %c0_38 = arith.constant 0 : index
    %c1_39 = arith.constant 1 : index
    %c0_40 = arith.constant 0 : index
    %17 = vector.load %arg9[%c0_37, %c0_38, %c1_39, %c0_40] : memref<2x10x10x4xf32, #tpu.memory_space<vmem>>, vector<2x8x8x4xf32>
    %18 = vector.shape_cast %17 : vector<2x8x8x4xf32> to vector<128x4xf32>
    %c0_41 = arith.constant 0 : index
    %c4_42 = arith.constant 4 : index
    %19 = vector.load %arg11[%c0_41, %c4_42] : memref<128x36xf32, #tpu.memory_space<vmem>>, vector<128x4xf32>
    tpu.vector_store %arg11[%c0_41, %c4_42], %18 {strides = array<i32>} : memref<128x36xf32, #tpu.memory_space<vmem>>, vector<128x4xf32>,
    %c0_43 = arith.constant 0 : index
    %c0_44 = arith.constant 0 : index
    %c2_45 = arith.constant 2 : index
    %c0_46 = arith.constant 0 : index
    %20 = vector.load %arg9[%c0_43, %c0_44, %c2_45, %c0_46] : memref<2x10x10x4xf32, #tpu.memory_space<vmem>>, vector<2x8x8x4xf32>
    %21 = vector.shape_cast %20 : vector<2x8x8x4xf32> to vector<128x4xf32>
    %c0_47 = arith.constant 0 : index
    %c8 = arith.constant 8 : index
    %22 = vector.load %arg11[%c0_47, %c8] : memref<128x36xf32, #tpu.memory_space<vmem>>, vector<128x4xf32>
    tpu.vector_store %arg11[%c0_47, %c8], %21 {strides = array<i32>} : memref<128x36xf32, #tpu.memory_space<vmem>>, vector<128x4xf32>,
    %c0_48 = arith.constant 0 : index
    %c1_49 = arith.constant 1 : index
    %c0_50 = arith.constant 0 : index
    %c0_51 = arith.constant 0 : index
    %23 = vector.load %arg9[%c0_48, %c1_49, %c0_50, %c0_51] : memref<2x10x10x4xf32, #tpu.memory_space<vmem>>, vector<2x8x8x4xf32>
    %24 = vector.shape_cast %23 : vector<2x8x8x4xf32> to vector<128x4xf32>
    %c0_52 = arith.constant 0 : index
    %c12 = arith.constant 12 : index
    %25 = vector.load %arg11[%c0_52, %c12] : memref<128x36xf32, #tpu.memory_space<vmem>>, vector<128x4xf32>
    tpu.vector_store %arg11[%c0_52, %c12], %24 {strides = array<i32>} : memref<128x36xf32, #tpu.memory_space<vmem>>, vector<128x4xf32>,
    %c0_53 = arith.constant 0 : index
    %c1_54 = arith.constant 1 : index
    %c1_55 = arith.constant 1 : index
    %c0_56 = arith.constant 0 : index
    %26 = vector.load %arg9[%c0_53, %c1_54, %c1_55, %c0_56] : memref<2x10x10x4xf32, #tpu.memory_space<vmem>>, vector<2x8x8x4xf32>
    %27 = vector.shape_cast %26 : vector<2x8x8x4xf32> to vector<128x4xf32>
    %c0_57 = arith.constant 0 : index
    %c16 = arith.constant 16 : index
    %28 = vector.load %arg11[%c0_57, %c16] : memref<128x36xf32, #tpu.memory_space<vmem>>, vector<128x4xf32>
    tpu.vector_store %arg11[%c0_57, %c16], %27 {strides = array<i32>} : memref<128x36xf32, #tpu.memory_space<vmem>>, vector<128x4xf32>,
    %c0_58 = arith.constant 0 : index
    %c1_59 = arith.constant 1 : index
    %c2_60 = arith.constant 2 : index
    %c0_61 = arith.constant 0 : index
    %29 = vector.load %arg9[%c0_58, %c1_59, %c2_60, %c0_61] : memref<2x10x10x4xf32, #tpu.memory_space<vmem>>, vector<2x8x8x4xf32>
    %30 = vector.shape_cast %29 : vector<2x8x8x4xf32> to vector<128x4xf32>
    %c0_62 = arith.constant 0 : index
    %c20 = arith.constant 20 : index
    %31 = vector.load %arg11[%c0_62, %c20] : memref<128x36xf32, #tpu.memory_space<vmem>>, vector<128x4xf32>
    tpu.vector_store %arg11[%c0_62, %c20], %30 {strides = array<i32>} : memref<128x36xf32, #tpu.memory_space<vmem>>, vector<128x4xf32>,
    %c0_63 = arith.constant 0 : index
    %c2_64 = arith.constant 2 : index
    %c0_65 = arith.constant 0 : index
    %c0_66 = arith.constant 0 : index
    %32 = vector.load %arg9[%c0_63, %c2_64, %c0_65, %c0_66] : memref<2x10x10x4xf32, #tpu.memory_space<vmem>>, vector<2x8x8x4xf32>
    %33 = vector.shape_cast %32 : vector<2x8x8x4xf32> to vector<128x4xf32>
    %c0_67 = arith.constant 0 : index
    %c24 = arith.constant 24 : index
    %34 = vector.load %arg11[%c0_67, %c24] : memref<128x36xf32, #tpu.memory_space<vmem>>, vector<128x4xf32>
    tpu.vector_store %arg11[%c0_67, %c24], %33 {strides = array<i32>} : memref<128x36xf32, #tpu.memory_space<vmem>>, vector<128x4xf32>,
    %c0_68 = arith.constant 0 : index
    %c2_69 = arith.constant 2 : index
    %c1_70 = arith.constant 1 : index
    %c0_71 = arith.constant 0 : index
    %35 = vector.load %arg9[%c0_68, %c2_69, %c1_70, %c0_71] : memref<2x10x10x4xf32, #tpu.memory_space<vmem>>, vector<2x8x8x4xf32>
    %36 = vector.shape_cast %35 : vector<2x8x8x4xf32> to vector<128x4xf32>
    %c0_72 = arith.constant 0 : index
    %c28 = arith.constant 28 : index
    %37 = vector.load %arg11[%c0_72, %c28] : memref<128x36xf32, #tpu.memory_space<vmem>>, vector<128x4xf32>
    tpu.vector_store %arg11[%c0_72, %c28], %36 {strides = array<i32>} : memref<128x36xf32, #tpu.memory_space<vmem>>, vector<128x4xf32>,
    %c0_73 = arith.constant 0 : index
    %c2_74 = arith.constant 2 : index
    %c2_75 = arith.constant 2 : index
    %c0_76 = arith.constant 0 : index
    %38 = vector.load %arg9[%c0_73, %c2_74, %c2_75, %c0_76] : memref<2x10x10x4xf32, #tpu.memory_space<vmem>>, vector<2x8x8x4xf32>
    %39 = vector.shape_cast %38 : vector<2x8x8x4xf32> to vector<128x4xf32>
    %c0_77 = arith.constant 0 : index
    %c32 = arith.constant 32 : index
    %40 = vector.load %arg11[%c0_77, %c32] : memref<128x36xf32, #tpu.memory_space<vmem>>, vector<128x4xf32>
    tpu.vector_store %arg11[%c0_77, %c32], %39 {strides = array<i32>} : memref<128x36xf32, #tpu.memory_space<vmem>>, vector<128x4xf32>,
    %c0_78 = arith.constant 0 : index
    %c0_79 = arith.constant 0 : index
    %41 = vector.load %arg11[%c0_78, %c0_79] : memref<128x36xf32, #tpu.memory_space<vmem>>, vector<128x36xf32>
    %c0_80 = arith.constant 0 : index
    %c0_81 = arith.constant 0 : index
    %42 = vector.load %arg2[%c0_80, %c0_81] : memref<36x16xf32, #tpu.memory_space<vmem>>, vector<36x16xf32>
    %cst_82 = arith.constant dense<0.000000e+00> : vector<128x16xf32>
    %43 = tpu.matmul %41, %42, %cst_82 {dimension_numbers = #tpu.dot_dimension_numbers<[1], [0], [0], [1], [0, 0, 1, 1], [], []>} : vector<128x36xf32>, vector<36x16xf32>, vector<128x16xf32> -> vector<128x16xf32>
    %cst_83 = arith.constant dense<0.000000e+00> : vector<16xf32>
    %44 = vector.multi_reduction <add>, %43, %cst_83 [0] : vector<128x16xf32> to vector<16xf32>
    %45 = vector.shape_cast %44 : vector<16xf32> to vector<1x16xf32>
    %cst_84 = arith.constant 1.280000e+02 : f32
    %46 = vector.broadcast %cst_84 : f32 to vector<1x16xf32>
    %47 = arith.divf %45, %46 : vector<1x16xf32>
    %48 = vector.broadcast %47 : vector<1x16xf32> to vector<128x16xf32>
    %49 = arith.subf %43, %48 : vector<128x16xf32>
    %50 = arith.mulf %49, %49 : vector<128x16xf32>
    %cst_85 = arith.constant dense<0.000000e+00> : vector<16xf32>
    %51 = vector.multi_reduction <add>, %50, %cst_85 [0] : vector<128x16xf32> to vector<16xf32>
    %52 = vector.shape_cast %51 : vector<16xf32> to vector<1x16xf32>
    %cst_86 = arith.constant 1.280000e+02 : f32
    %53 = vector.broadcast %cst_86 : f32 to vector<1x16xf32>
    %54 = arith.divf %52, %53 : vector<1x16xf32>
    %c0_87 = arith.constant 0 : index
    %c0_88 = arith.constant 0 : index
    %55 = vector.load %arg3[%c0_87, %c0_88] : memref<1x16xf32, #tpu.memory_space<vmem>>, vector<1x16xf32>
    %cst_89 = arith.constant 9.99999974E-6 : f32
    %56 = vector.broadcast %cst_89 : f32 to vector<1x16xf32>
    %57 = arith.addf %54, %56 : vector<1x16xf32>
    %58 = math.rsqrt %57 : vector<1x16xf32>
    %59 = arith.mulf %55, %58 : vector<1x16xf32>
    %60 = vector.broadcast %59 : vector<1x16xf32> to vector<128x16xf32>
    %61 = arith.mulf %49, %60 : vector<128x16xf32>
    %c0_90 = arith.constant 0 : index
    %c0_91 = arith.constant 0 : index
    %62 = vector.load %arg4[%c0_90, %c0_91] : memref<1x16xf32, #tpu.memory_space<vmem>>, vector<1x16xf32>
    %63 = vector.broadcast %62 : vector<1x16xf32> to vector<128x16xf32>
    %64 = arith.addf %61, %63 : vector<128x16xf32>
    %cst_92 = arith.constant 0.000000e+00 : f32
    %65 = vector.broadcast %cst_92 : f32 to vector<128x16xf32>
    %66 = arith.maximumf %64, %65 : vector<128x16xf32>
    %67 = vector.shape_cast %66 : vector<128x16xf32> to vector<2x8x8x16xf32>
    %cst_93 = arith.constant 0.000000e+00 : f32
    %68 = vector.broadcast %cst_93 : f32 to vector<2x1x10x16xf32>
    %cst_94 = arith.constant 0.000000e+00 : f32
    %69 = vector.broadcast %cst_94 : f32 to vector<2x8x1x16xf32>
    %c0_95 = arith.constant 0 : index
    %c0_96 = arith.constant 0 : index
    %c0_97 = arith.constant 0 : index
    %c0_98 = arith.constant 0 : index
    %70 = vector.load %arg10[%c0_95, %c0_96, %c0_97, %c0_98] : memref<2x10x10x16xf32, #tpu.memory_space<vmem>>, vector<2x1x10x16xf32>
    tpu.vector_store %arg10[%c0_95, %c0_96, %c0_97, %c0_98], %68 {strides = array<i32>} : memref<2x10x10x16xf32, #tpu.memory_space<vmem>>, vector<2x1x10x16xf32>,
    %c0_99 = arith.constant 0 : index
    %c9_100 = arith.constant 9 : index
    %c0_101 = arith.constant 0 : index
    %c0_102 = arith.constant 0 : index
    %71 = vector.load %arg10[%c0_99, %c9_100, %c0_101, %c0_102] : memref<2x10x10x16xf32, #tpu.memory_space<vmem>>, vector<2x1x10x16xf32>
    tpu.vector_store %arg10[%c0_99, %c9_100, %c0_101, %c0_102], %68 {strides = array<i32>} : memref<2x10x10x16xf32, #tpu.memory_space<vmem>>, vector<2x1x10x16xf32>,
    %c0_103 = arith.constant 0 : index
    %c1_104 = arith.constant 1 : index
    %c0_105 = arith.constant 0 : index
    %c0_106 = arith.constant 0 : index
    %72 = vector.load %arg10[%c0_103, %c1_104, %c0_105, %c0_106] : memref<2x10x10x16xf32, #tpu.memory_space<vmem>>, vector<2x8x1x16xf32>
    tpu.vector_store %arg10[%c0_103, %c1_104, %c0_105, %c0_106], %69 {strides = array<i32>} : memref<2x10x10x16xf32, #tpu.memory_space<vmem>>, vector<2x8x1x16xf32>,
    %c0_107 = arith.constant 0 : index
    %c1_108 = arith.constant 1 : index
    %c9_109 = arith.constant 9 : index
    %c0_110 = arith.constant 0 : index
    %73 = vector.load %arg10[%c0_107, %c1_108, %c9_109, %c0_110] : memref<2x10x10x16xf32, #tpu.memory_space<vmem>>, vector<2x8x1x16xf32>
    tpu.vector_store %arg10[%c0_107, %c1_108, %c9_109, %c0_110], %69 {strides = array<i32>} : memref<2x10x10x16xf32, #tpu.memory_space<vmem>>, vector<2x8x1x16xf32>,
    %c0_111 = arith.constant 0 : index
    %c1_112 = arith.constant 1 : index
    %c1_113 = arith.constant 1 : index
    %c0_114 = arith.constant 0 : index
    %74 = vector.load %arg10[%c0_111, %c1_112, %c1_113, %c0_114] : memref<2x10x10x16xf32, #tpu.memory_space<vmem>>, vector<2x8x8x16xf32>
    tpu.vector_store %arg10[%c0_111, %c1_112, %c1_113, %c0_114], %67 {strides = array<i32>} : memref<2x10x10x16xf32, #tpu.memory_space<vmem>>, vector<2x8x8x16xf32>,
    %c0_115 = arith.constant 0 : index
    %c0_116 = arith.constant 0 : index
    %c0_117 = arith.constant 0 : index
    %c0_118 = arith.constant 0 : index
    %75 = vector.load %arg10[%c0_115, %c0_116, %c0_117, %c0_118] : memref<2x10x10x16xf32, #tpu.memory_space<vmem>>, vector<2x8x8x16xf32>
    %76 = vector.shape_cast %75 : vector<2x8x8x16xf32> to vector<128x16xf32>
    %c0_119 = arith.constant 0 : index
    %c0_120 = arith.constant 0 : index
    %77 = vector.load %arg12[%c0_119, %c0_120] : memref<128x144xf32, #tpu.memory_space<vmem>>, vector<128x16xf32>
    tpu.vector_store %arg12[%c0_119, %c0_120], %76 {strides = array<i32>} : memref<128x144xf32, #tpu.memory_space<vmem>>, vector<128x16xf32>,
    %c0_121 = arith.constant 0 : index
    %c0_122 = arith.constant 0 : index
    %c1_123 = arith.constant 1 : index
    %c0_124 = arith.constant 0 : index
    %78 = vector.load %arg10[%c0_121, %c0_122, %c1_123, %c0_124] : memref<2x10x10x16xf32, #tpu.memory_space<vmem>>, vector<2x8x8x16xf32>
    %79 = vector.shape_cast %78 : vector<2x8x8x16xf32> to vector<128x16xf32>
    %c0_125 = arith.constant 0 : index
    %c16_126 = arith.constant 16 : index
    %80 = vector.load %arg12[%c0_125, %c16_126] : memref<128x144xf32, #tpu.memory_space<vmem>>, vector<128x16xf32>
    tpu.vector_store %arg12[%c0_125, %c16_126], %79 {strides = array<i32>} : memref<128x144xf32, #tpu.memory_space<vmem>>, vector<128x16xf32>,
    %c0_127 = arith.constant 0 : index
    %c0_128 = arith.constant 0 : index
    %c2_129 = arith.constant 2 : index
    %c0_130 = arith.constant 0 : index
    %81 = vector.load %arg10[%c0_127, %c0_128, %c2_129, %c0_130] : memref<2x10x10x16xf32, #tpu.memory_space<vmem>>, vector<2x8x8x16xf32>
    %82 = vector.shape_cast %81 : vector<2x8x8x16xf32> to vector<128x16xf32>
    %c0_131 = arith.constant 0 : index
    %c32_132 = arith.constant 32 : index
    %83 = vector.load %arg12[%c0_131, %c32_132] : memref<128x144xf32, #tpu.memory_space<vmem>>, vector<128x16xf32>
    tpu.vector_store %arg12[%c0_131, %c32_132], %82 {strides = array<i32>} : memref<128x144xf32, #tpu.memory_space<vmem>>, vector<128x16xf32>,
    %c0_133 = arith.constant 0 : index
    %c1_134 = arith.constant 1 : index
    %c0_135 = arith.constant 0 : index
    %c0_136 = arith.constant 0 : index
    %84 = vector.load %arg10[%c0_133, %c1_134, %c0_135, %c0_136] : memref<2x10x10x16xf32, #tpu.memory_space<vmem>>, vector<2x8x8x16xf32>
    %85 = vector.shape_cast %84 : vector<2x8x8x16xf32> to vector<128x16xf32>
    %c0_137 = arith.constant 0 : index
    %c48 = arith.constant 48 : index
    %86 = vector.load %arg12[%c0_137, %c48] : memref<128x144xf32, #tpu.memory_space<vmem>>, vector<128x16xf32>
    tpu.vector_store %arg12[%c0_137, %c48], %85 {strides = array<i32>} : memref<128x144xf32, #tpu.memory_space<vmem>>, vector<128x16xf32>,
    %c0_138 = arith.constant 0 : index
    %c1_139 = arith.constant 1 : index
    %c1_140 = arith.constant 1 : index
    %c0_141 = arith.constant 0 : index
    %87 = vector.load %arg10[%c0_138, %c1_139, %c1_140, %c0_141] : memref<2x10x10x16xf32, #tpu.memory_space<vmem>>, vector<2x8x8x16xf32>
    %88 = vector.shape_cast %87 : vector<2x8x8x16xf32> to vector<128x16xf32>
    %c0_142 = arith.constant 0 : index
    %c64 = arith.constant 64 : index
    %89 = vector.load %arg12[%c0_142, %c64] : memref<128x144xf32, #tpu.memory_space<vmem>>, vector<128x16xf32>
    tpu.vector_store %arg12[%c0_142, %c64], %88 {strides = array<i32>} : memref<128x144xf32, #tpu.memory_space<vmem>>, vector<128x16xf32>,
    %c0_143 = arith.constant 0 : index
    %c1_144 = arith.constant 1 : index
    %c2_145 = arith.constant 2 : index
    %c0_146 = arith.constant 0 : index
    %90 = vector.load %arg10[%c0_143, %c1_144, %c2_145, %c0_146] : memref<2x10x10x16xf32, #tpu.memory_space<vmem>>, vector<2x8x8x16xf32>
    %91 = vector.shape_cast %90 : vector<2x8x8x16xf32> to vector<128x16xf32>
    %c0_147 = arith.constant 0 : index
    %c80 = arith.constant 80 : index
    %92 = vector.load %arg12[%c0_147, %c80] : memref<128x144xf32, #tpu.memory_space<vmem>>, vector<128x16xf32>
    tpu.vector_store %arg12[%c0_147, %c80], %91 {strides = array<i32>} : memref<128x144xf32, #tpu.memory_space<vmem>>, vector<128x16xf32>,
    %c0_148 = arith.constant 0 : index
    %c2_149 = arith.constant 2 : index
    %c0_150 = arith.constant 0 : index
    %c0_151 = arith.constant 0 : index
    %93 = vector.load %arg10[%c0_148, %c2_149, %c0_150, %c0_151] : memref<2x10x10x16xf32, #tpu.memory_space<vmem>>, vector<2x8x8x16xf32>
    %94 = vector.shape_cast %93 : vector<2x8x8x16xf32> to vector<128x16xf32>
    %c0_152 = arith.constant 0 : index
    %c96 = arith.constant 96 : index
    %95 = vector.load %arg12[%c0_152, %c96] : memref<128x144xf32, #tpu.memory_space<vmem>>, vector<128x16xf32>
    tpu.vector_store %arg12[%c0_152, %c96], %94 {strides = array<i32>} : memref<128x144xf32, #tpu.memory_space<vmem>>, vector<128x16xf32>,
    %c0_153 = arith.constant 0 : index
    %c2_154 = arith.constant 2 : index
    %c1_155 = arith.constant 1 : index
    %c0_156 = arith.constant 0 : index
    %96 = vector.load %arg10[%c0_153, %c2_154, %c1_155, %c0_156] : memref<2x10x10x16xf32, #tpu.memory_space<vmem>>, vector<2x8x8x16xf32>
    %97 = vector.shape_cast %96 : vector<2x8x8x16xf32> to vector<128x16xf32>
    %c0_157 = arith.constant 0 : index
    %c112 = arith.constant 112 : index
    %98 = vector.load %arg12[%c0_157, %c112] : memref<128x144xf32, #tpu.memory_space<vmem>>, vector<128x16xf32>
    tpu.vector_store %arg12[%c0_157, %c112], %97 {strides = array<i32>} : memref<128x144xf32, #tpu.memory_space<vmem>>, vector<128x16xf32>,
    %c0_158 = arith.constant 0 : index
    %c2_159 = arith.constant 2 : index
    %c2_160 = arith.constant 2 : index
    %c0_161 = arith.constant 0 : index
    %99 = vector.load %arg10[%c0_158, %c2_159, %c2_160, %c0_161] : memref<2x10x10x16xf32, #tpu.memory_space<vmem>>, vector<2x8x8x16xf32>
    %100 = vector.shape_cast %99 : vector<2x8x8x16xf32> to vector<128x16xf32>
    %c0_162 = arith.constant 0 : index
    %c128 = arith.constant 128 : index
    %101 = vector.load %arg12[%c0_162, %c128] : memref<128x144xf32, #tpu.memory_space<vmem>>, vector<128x16xf32>
    tpu.vector_store %arg12[%c0_162, %c128], %100 {strides = array<i32>} : memref<128x144xf32, #tpu.memory_space<vmem>>, vector<128x16xf32>,
    %c0_163 = arith.constant 0 : index
    %c0_164 = arith.constant 0 : index
    %102 = vector.load %arg12[%c0_163, %c0_164] : memref<128x144xf32, #tpu.memory_space<vmem>>, vector<128x144xf32>
    %c0_165 = arith.constant 0 : index
    %c0_166 = arith.constant 0 : index
    %103 = vector.load %arg5[%c0_165, %c0_166] : memref<144x16xf32, #tpu.memory_space<vmem>>, vector<144x16xf32>
    %cst_167 = arith.constant dense<0.000000e+00> : vector<128x16xf32>
    %104 = tpu.matmul %102, %103, %cst_167 {dimension_numbers = #tpu.dot_dimension_numbers<[1], [0], [0], [1], [0, 0, 1, 1], [], []>} : vector<128x144xf32>, vector<144x16xf32>, vector<128x16xf32> -> vector<128x16xf32>
    %cst_168 = arith.constant dense<0.000000e+00> : vector<16xf32>
    %105 = vector.multi_reduction <add>, %104, %cst_168 [0] : vector<128x16xf32> to vector<16xf32>
    %106 = vector.shape_cast %105 : vector<16xf32> to vector<1x16xf32>
    %cst_169 = arith.constant 1.280000e+02 : f32
    %107 = vector.broadcast %cst_169 : f32 to vector<1x16xf32>
    %108 = arith.divf %106, %107 : vector<1x16xf32>
    %109 = vector.broadcast %108 : vector<1x16xf32> to vector<128x16xf32>
    %110 = arith.subf %104, %109 : vector<128x16xf32>
    %111 = arith.mulf %110, %110 : vector<128x16xf32>
    %cst_170 = arith.constant dense<0.000000e+00> : vector<16xf32>
    %112 = vector.multi_reduction <add>, %111, %cst_170 [0] : vector<128x16xf32> to vector<16xf32>
    %113 = vector.shape_cast %112 : vector<16xf32> to vector<1x16xf32>
    %cst_171 = arith.constant 1.280000e+02 : f32
    %114 = vector.broadcast %cst_171 : f32 to vector<1x16xf32>
    %115 = arith.divf %113, %114 : vector<1x16xf32>
    %c0_172 = arith.constant 0 : index
    %c0_173 = arith.constant 0 : index
    %116 = vector.load %arg6[%c0_172, %c0_173] : memref<1x16xf32, #tpu.memory_space<vmem>>, vector<1x16xf32>
    %cst_174 = arith.constant 9.99999974E-6 : f32
    %117 = vector.broadcast %cst_174 : f32 to vector<1x16xf32>
    %118 = arith.addf %115, %117 : vector<1x16xf32>
    %119 = math.rsqrt %118 : vector<1x16xf32>
    %120 = arith.mulf %116, %119 : vector<1x16xf32>
    %121 = vector.broadcast %120 : vector<1x16xf32> to vector<128x16xf32>
    %122 = arith.mulf %110, %121 : vector<128x16xf32>
    %c0_175 = arith.constant 0 : index
    %c0_176 = arith.constant 0 : index
    %123 = vector.load %arg7[%c0_175, %c0_176] : memref<1x16xf32, #tpu.memory_space<vmem>>, vector<1x16xf32>
    %124 = vector.broadcast %123 : vector<1x16xf32> to vector<128x16xf32>
    %125 = arith.addf %122, %124 : vector<128x16xf32>
    %cst_177 = arith.constant 0.000000e+00 : f32
    %126 = vector.broadcast %cst_177 : f32 to vector<128x16xf32>
    %127 = arith.maximumf %125, %126 : vector<128x16xf32>
    %c0_178 = arith.constant 0 : index
    %c0_179 = arith.constant 0 : index
    %128 = vector.load %arg8[%c0_178, %c0_179] : memref<128x16xf32, #tpu.memory_space<vmem>>, vector<128x16xf32>
    tpu.vector_store %arg8[%c0_178, %c0_179], %127 {strides = array<i32>} : memref<128x16xf32, #tpu.memory_space<vmem>>, vector<128x16xf32>,
    return
  }
  func.func @transform_0(%arg0: i32) -> (i32, i32, i32, i32) {
    %c0_i32 = arith.constant 0 : i32
    %c0_i32_0 = arith.constant 0 : i32
    %c0_i32_1 = arith.constant 0 : i32
    %c0_i32_2 = arith.constant 0 : i32
    %c0_i32_3 = arith.constant 0 : i32
    return %c0_i32, %c0_i32_0, %c0_i32_1, %c0_i32_2 : i32, i32, i32, i32
  }
  func.func @transform_1(%arg0: i32) -> (i32, i32) {
    %c0_i32 = arith.constant 0 : i32
    %c0_i32_0 = arith.constant 0 : i32
    %c0_i32_1 = arith.constant 0 : i32
    return %c0_i32, %c0_i32_0 : i32, i32
  }
  func.func @transform_2(%arg0: i32) -> (i32, i32) {
    %c0_i32 = arith.constant 0 : i32
    %c0_i32_0 = arith.constant 0 : i32
    %c0_i32_1 = arith.constant 0 : i32
    return %c0_i32, %c0_i32_0 : i32, i32
  }
  func.func @transform_3(%arg0: i32) -> (i32, i32) {
    %c0_i32 = arith.constant 0 : i32
    %c0_i32_0 = arith.constant 0 : i32
    %c0_i32_1 = arith.constant 0 : i32
    return %c0_i32, %c0_i32_0 : i32, i32
  }
  func.func @transform_4(%arg0: i32) -> (i32, i32) {
    %c0_i32 = arith.constant 0 : i32
    %c0_i32_0 = arith.constant 0 : i32
    %c0_i32_1 = arith.constant 0 : i32
    return %c0_i32, %c0_i32_0 : i32, i32
  }
  func.func @transform_5(%arg0: i32) -> (i32, i32) {
    %c0_i32 = arith.constant 0 : i32
    %c0_i32_0 = arith.constant 0 : i32
    %c0_i32_1 = arith.constant 0 : i32
    return %c0_i32, %c0_i32_0 : i32, i32
  }
  func.func @transform_6(%arg0: i32) -> (i32, i32) {
    %c0_i32 = arith.constant 0 : i32
    %c0_i32_0 = arith.constant 0 : i32
    %c0_i32_1 = arith.constant 0 : i32
    return %c0_i32, %c0_i32_0 : i32, i32
  }
  func.func @transform_7(%arg0: i32) -> (i32, i32) {
    %c0_i32 = arith.constant 0 : i32
    %c0_i32_0 = arith.constant 0 : i32
    %c0_i32_1 = arith.constant 0 : i32
    return %c0_i32, %c0_i32_0 : i32, i32
  }
}

</mosaic_0001>

<llo_original>
// kernel: tpu_custom_call.1
$region0: #{tpu_custom_call.1}
  #allocation0 [shape = 'u32[]', space=smem, size = 0x4, offset = 0x4, fixed_abs, tag = 'smem constant byte address 0x4 - core index']
  #allocation1 [shape = 'u32[72,128]{1,0:T(1,128)}', space=vmem, size = 0x9000, scoped, tag = 'internal scratch']
  #allocation2 [shape = 'f32[2,10,10,4]{3,2,1,0:T(8,128)}', space=vmem, size = 0x28000, scoped, tag = 'scratch operand']
  #allocation3 [shape = 'f32[2,10,10,16]{3,2,1,0:T(8,128)}', space=vmem, size = 0x28000, scoped, tag = 'scratch operand']
  #allocation4 [shape = 'f32[128,36]{1,0:T(8,128)}', space=vmem, size = 0x10000, scoped, tag = 'scratch operand']
  #allocation5 [shape = 'f32[128,144]{1,0:T(8,128)}', space=vmem, size = 0x20000, scoped, tag = 'scratch operand']
  %s0 = inlined_call_operand.vmem [shape: f32[8,8,8,4], index: 0, kind: input, shape index: {}]
  %s1 = inlined_call_operand.vmem [shape: f32[36,16], index: 1, kind: input, shape index: {}]
  %s2 = inlined_call_operand.vmem [shape: f32[1,16], index: 2, kind: input, shape index: {}]
  %s3 = inlined_call_operand.vmem [shape: f32[1,16], index: 3, kind: input, shape index: {}]
  %s4 = inlined_call_operand.vmem [shape: f32[144,16], index: 4, kind: input, shape index: {}]
  %s5 = inlined_call_operand.vmem [shape: f32[1,16], index: 5, kind: input, shape index: {}]
  %s6 = inlined_call_operand.vmem [shape: f32[1,16], index: 6, kind: input, shape index: {}]
  %s7 = inlined_call_operand.vmem [shape: f32[128,16], index: 7, kind: output, shape index: {}]
  %s8 = sld [smem:[#allocation0]]
  $region38: #{tpu_custom_call.1} parent=0
    _
  %s10 = ssub.s32 1, %s8
  %s11 = scalar_select 0, %s10, %s8
  // Predicated region
  $region2: #{tpu_custom_call.1} parent=0 // pred_check
    _
  $region3: #{tpu_custom_call.1} parent=0 // pred_check_branch
    %13 = sbr.rel (0) target = $region5
  $region4: #{tpu_custom_call.1} parent=0 // pred_region
    _
  $region5: #{tpu_custom_call.1} parent=0 // pred_fallthru
    _
  // Predicated region
  $region6: #{tpu_custom_call.1} parent=0 // pred_check
    _
  $region7: #{tpu_custom_call.1} parent=0 // pred_check_branch
    %15 = sbr.rel (0) target = $region9
  $region8: #{tpu_custom_call.1} parent=0 // pred_region
    _
  $region9: #{tpu_custom_call.1} parent=0 // pred_fallthru
    _
  // Predicated region
  $region10: #{tpu_custom_call.1} parent=0 // pred_check
    _
  $region11: #{tpu_custom_call.1} parent=0 // pred_check_branch
    %17 = sbr.rel (0) target = $region13
  $region12: #{tpu_custom_call.1} parent=0 // pred_region
    _
  $region13: #{tpu_custom_call.1} parent=0 // pred_fallthru
    _
  // Predicated region
  $region14: #{tpu_custom_call.1} parent=0 // pred_check
    _
  $region15: #{tpu_custom_call.1} parent=0 // pred_check_branch
    %19 = sbr.rel (0) target = $region17
  $region16: #{tpu_custom_call.1} parent=0 // pred_region
    _
  $region17: #{tpu_custom_call.1} parent=0 // pred_fallthru
    _
  // Predicated region
  $region18: #{tpu_custom_call.1} parent=0 // pred_check
    _
  $region19: #{tpu_custom_call.1} parent=0 // pred_check_branch
    %21 = sbr.rel (0) target = $region21
  $region20: #{tpu_custom_call.1} parent=0 // pred_region
    _
  $region21: #{tpu_custom_call.1} parent=0 // pred_fallthru
    _
  // Predicated region
  $region22: #{tpu_custom_call.1} parent=0 // pred_check
    _
  $region23: #{tpu_custom_call.1} parent=0 // pred_check_branch
    %23 = sbr.rel (0) target = $region25
  $region24: #{tpu_custom_call.1} parent=0 // pred_region
    _
  $region25: #{tpu_custom_call.1} parent=0 // pred_fallthru
    _
  // Predicated region
  $region26: #{tpu_custom_call.1} parent=0 // pred_check
    _
  $region27: #{tpu_custom_call.1} parent=0 // pred_check_branch
    %25 = sbr.rel (0) target = $region29
  $region28: #{tpu_custom_call.1} parent=0 // pred_region
    _
  $region29: #{tpu_custom_call.1} parent=0 // pred_fallthru
    _
  %v26 = vld [vmem:[%s0] sm:$0xff]
  %v27 = vld [vmem:[%s0 + $0x8] sm:$0xff]
  %v28 = vld [vmem:[%s0 + $0x10] sm:$0xff]
  %v29 = vld [vmem:[%s0 + $0x18] sm:$0xff]
  %v30 = vld [vmem:[%s0 + $0x20] sm:$0xff]
  %v31 = vld [vmem:[%s0 + $0x28] sm:$0xff]
  %v32 = vld [vmem:[%s0 + $0x30] sm:$0xff]
  %v33 = vld [vmem:[%s0 + $0x38] sm:$0xff]
  %v34 = vld [vmem:[%s0 + $0x40] sm:$0xff]
  %v35 = vld [vmem:[%s0 + $0x48] sm:$0xff]
  %v36 = vld [vmem:[%s0 + $0x50] sm:$0xff]
  %v37 = vld [vmem:[%s0 + $0x58] sm:$0xff]
  %v38 = vld [vmem:[%s0 + $0x60] sm:$0xff]
  %v39 = vld [vmem:[%s0 + $0x68] sm:$0xff]
  %v40 = vld [vmem:[%s0 + $0x70] sm:$0xff]
  %v41 = vld [vmem:[%s0 + $0x78] sm:$0xff]
  %s42 = scalar_lea.vmem %s0, 128
  %v43 = vld [vmem:[%s42] sm:$0xff]
  %v44 = vld [vmem:[%s42 + $0x8] sm:$0xff]
  %v45 = vld [vmem:[%s42 + $0x10] sm:$0xff]
  %v46 = vld [vmem:[%s42 + $0x18] sm:$0xff]
  %v47 = vld [vmem:[%s42 + $0x20] sm:$0xff]
  %v48 = vld [vmem:[%s42 + $0x28] sm:$0xff]
  %v49 = vld [vmem:[%s42 + $0x30] sm:$0xff]
  %v50 = vld [vmem:[%s42 + $0x38] sm:$0xff]
  %v51 = vld [vmem:[%s42 + $0x40] sm:$0xff]
  %v52 = vld [vmem:[%s42 + $0x48] sm:$0xff]
  %v53 = vld [vmem:[%s42 + $0x50] sm:$0xff]
  %v54 = vld [vmem:[%s42 + $0x58] sm:$0xff]
  %v55 = vld [vmem:[%s42 + $0x60] sm:$0xff]
  %v56 = vld [vmem:[%s42 + $0x68] sm:$0xff]
  %v57 = vld [vmem:[%s42 + $0x70] sm:$0xff]
  %v58 = vld [vmem:[%s42 + $0x78] sm:$0xff]
  %s59 = scalar_lea.vmem %s0, 256
  %v60 = vld [vmem:[%s59] sm:$0xff]
  %v61 = vld [vmem:[%s59 + $0x8] sm:$0xff]
  %v62 = vld [vmem:[%s59 + $0x10] sm:$0xff]
  %v63 = vld [vmem:[%s59 + $0x18] sm:$0xff]
  %v64 = vld [vmem:[%s59 + $0x20] sm:$0xff]
  %v65 = vld [vmem:[%s59 + $0x28] sm:$0xff]
  %v66 = vld [vmem:[%s59 + $0x30] sm:$0xff]
  %v67 = vld [vmem:[%s59 + $0x38] sm:$0xff]
  %v68 = vld [vmem:[%s59 + $0x40] sm:$0xff]
  %v69 = vld [vmem:[%s59 + $0x48] sm:$0xff]
  %v70 = vld [vmem:[%s59 + $0x50] sm:$0xff]
  %v71 = vld [vmem:[%s59 + $0x58] sm:$0xff]
  %v72 = vld [vmem:[%s59 + $0x60] sm:$0xff]
  %v73 = vld [vmem:[%s59 + $0x68] sm:$0xff]
  %v74 = vld [vmem:[%s59 + $0x70] sm:$0xff]
  %v75 = vld [vmem:[%s59 + $0x78] sm:$0xff]
  %s76 = scalar_lea.vmem %s0, 384
  %v77 = vld [vmem:[%s76] sm:$0xff]
  %v78 = vld [vmem:[%s76 + $0x8] sm:$0xff]
  %v79 = vld [vmem:[%s76 + $0x10] sm:$0xff]
  %v80 = vld [vmem:[%s76 + $0x18] sm:$0xff]
  %v81 = vld [vmem:[%s76 + $0x20] sm:$0xff]
  %v82 = vld [vmem:[%s76 + $0x28] sm:$0xff]
  %v83 = vld [vmem:[%s76 + $0x30] sm:$0xff]
  %v84 = vld [vmem:[%s76 + $0x38] sm:$0xff]
  %v85 = vld [vmem:[%s76 + $0x40] sm:$0xff]
  %v86 = vld [vmem:[%s76 + $0x48] sm:$0xff]
  %v87 = vld [vmem:[%s76 + $0x50] sm:$0xff]
  %v88 = vld [vmem:[%s76 + $0x58] sm:$0xff]
  %v89 = vld [vmem:[%s76 + $0x60] sm:$0xff]
  %v90 = vld [vmem:[%s76 + $0x68] sm:$0xff]
  %v91 = vld [vmem:[%s76 + $0x70] sm:$0xff]
  %v92 = vld [vmem:[%s76 + $0x78] sm:$0xff]
  %v93 = vmax.f32 %v26, %v43
  %v94 = vmax.f32 %v27, %v44
  %v95 = vmax.f32 %v28, %v45
  %v96 = vmax.f32 %v29, %v46
  %v97 = vmax.f32 %v30, %v47
  %v98 = vmax.f32 %v31, %v48
  %v99 = vmax.f32 %v32, %v49
  %v100 = vmax.f32 %v33, %v50
  %v101 = vmax.f32 %v34, %v51
  %v102 = vmax.f32 %v35, %v52
  %v103 = vmax.f32 %v36, %v53
  %v104 = vmax.f32 %v37, %v54
  %v105 = vmax.f32 %v38, %v55
  %v106 = vmax.f32 %v39, %v56
  %v107 = vmax.f32 %v40, %v57
  %v108 = vmax.f32 %v41, %v58
  %v109 = vmax.f32 %v60, %v77
  %v110 = vmax.f32 %v61, %v78
  %v111 = vmax.f32 %v62, %v79
  %v112 = vmax.f32 %v63, %v80
  %v113 = vmax.f32 %v64, %v81
  %v114 = vmax.f32 %v65, %v82
  %v115 = vmax.f32 %v66, %v83
  %v116 = vmax.f32 %v67, %v84
  %v117 = vmax.f32 %v68, %v85
  %v118 = vmax.f32 %v69, %v86
  %v119 = vmax.f32 %v70, %v87
  %v120 = vmax.f32 %v71, %v88
  %v121 = vmax.f32 %v72, %v89
  %v122 = vmax.f32 %v73, %v90
  %v123 = vmax.f32 %v74, %v91
  %v124 = vmax.f32 %v75, %v92
  %v125 = vmax.f32 %v93, %v109
  %v126 = vmax.f32 %v94, %v110
  %v127 = vmax.f32 %v95, %v111
  %v128 = vmax.f32 %v96, %v112
  %v129 = vmax.f32 %v97, %v113
  %v130 = vmax.f32 %v98, %v114
  %v131 = vmax.f32 %v99, %v115
  %v132 = vmax.f32 %v100, %v116
  %v133 = vmax.f32 %v101, %v117
  %v134 = vmax.f32 %v102, %v118
  %v135 = vmax.f32 %v103, %v119
  %v136 = vmax.f32 %v104, %v120
  %v137 = vmax.f32 %v105, %v121
  %v138 = vmax.f32 %v106, %v122
  %v139 = vmax.f32 %v107, %v123
  %v140 = vmax.f32 %v108, %v124
  %vm141 = vcmask 31744
  %142 = vst.msk [vmem:[#allocation2] sm:$0xff] %vm141, 0.0
  %vm143 = vcmask 25600
  %144 = vst.msk [vmem:[#allocation2 + $0x8] sm:$0x3] %vm143, 0.0
  %145 = vst.msk [vmem:[#allocation2 + $0xa0] sm:$0xff] %vm141, 0.0
  %146 = vst.msk [vmem:[#allocation2 + $0xa8] sm:$0x3] %vm143, 0.0
  %s147 = scalar_lea.vmem [#allocation2], 144
  %148 = vst.msk [vmem:[%s147] sm:$0xff] %vm141, 0.0
  %149 = vst.msk [vmem:[%s147 + $0x8] sm:$0x3] %vm143, 0.0
  %150 = vst.msk [vmem:[%s147 + $0xa0] sm:$0xff] %vm141, 0.0
  %151 = vst.msk [vmem:[%s147 + $0xa8] sm:$0x3] %vm143, 0.0
  %s152 = scalar_lea.vmem [#allocation2], 16
  %vm153 = vcmask 24576
  %154 = vst.msk [vmem:[%s152] sm:$0x1] %vm153, 0.0
  %155 = vst.msk [vmem:[%s152 + $0x10] sm:$0x1] %vm153, 0.0
  %156 = vst.msk [vmem:[%s152 + $0x20] sm:$0x1] %vm153, 0.0
  %157 = vst.msk [vmem:[%s152 + $0x30] sm:$0x1] %vm153, 0.0
  %158 = vst.msk [vmem:[%s152 + $0x40] sm:$0x1] %vm153, 0.0
  %159 = vst.msk [vmem:[%s152 + $0x50] sm:$0x1] %vm153, 0.0
  %160 = vst.msk [vmem:[%s152 + $0x60] sm:$0x1] %vm153, 0.0
  %161 = vst.msk [vmem:[%s152 + $0x70] sm:$0x1] %vm153, 0.0
  %162 = vst.msk [vmem:[%s152 + $0xa0] sm:$0x1] %vm153, 0.0
  %163 = vst.msk [vmem:[%s152 + $0xb0] sm:$0x1] %vm153, 0.0
  %164 = vst.msk [vmem:[%s152 + $0xc0] sm:$0x1] %vm153, 0.0
  %165 = vst.msk [vmem:[%s152 + $0xd0] sm:$0x1] %vm153, 0.0
  %166 = vst.msk [vmem:[%s152 + $0xe0] sm:$0x1] %vm153, 0.0
  %167 = vst.msk [vmem:[%s152 + $0xf0] sm:$0x1] %vm153, 0.0
  %168 = vst.msk [vmem:[%s152 + $0x100] sm:$0x1] %vm153, 0.0
  %169 = vst.msk [vmem:[%s152 + $0x110] sm:$0x1] %vm153, 0.0
  %170 = vst.msk [vmem:[%s152 + $0x9] sm:$0x1] %vm153, 0.0
  %171 = vst.msk [vmem:[%s152 + $0x19] sm:$0x1] %vm153, 0.0
  %172 = vst.msk [vmem:[%s152 + $0x29] sm:$0x1] %vm153, 0.0
  %173 = vst.msk [vmem:[%s152 + $0x39] sm:$0x1] %vm153, 0.0
  %174 = vst.msk [vmem:[%s152 + $0x49] sm:$0x1] %vm153, 0.0
  %175 = vst.msk [vmem:[%s152 + $0x59] sm:$0x1] %vm153, 0.0
  %176 = vst.msk [vmem:[%s152 + $0x69] sm:$0x1] %vm153, 0.0
  %177 = vst.msk [vmem:[%s152 + $0x79] sm:$0x1] %vm153, 0.0
  %178 = vst.msk [vmem:[%s152 + $0xa9] sm:$0x1] %vm153, 0.0
  %179 = vst.msk [vmem:[%s152 + $0xb9] sm:$0x1] %vm153, 0.0
  %180 = vst.msk [vmem:[%s152 + $0xc9] sm:$0x1] %vm153, 0.0
  %181 = vst.msk [vmem:[%s152 + $0xd9] sm:$0x1] %vm153, 0.0
  %182 = vst.msk [vmem:[%s152 + $0xe9] sm:$0x1] %vm153, 0.0
  %183 = vst.msk [vmem:[%s152 + $0xf9] sm:$0x1] %vm153, 0.0
  %184 = vst.msk [vmem:[%s152 + $0x109] sm:$0x1] %vm153, 0.0
  %185 = vst.msk [vmem:[%s152 + $0x119] sm:$0x1] %vm153, 0.0
  %186 = vst.msk [vmem:[%s152 + $0x1] sm:$0xff] %vm141, %v125
  %187 = vst.msk [vmem:[%s152 + $0x11] sm:$0xff] %vm141, %v126
  %188 = vst.msk [vmem:[%s152 + $0x21] sm:$0xff] %vm141, %v127
  %189 = vst.msk [vmem:[%s152 + $0x31] sm:$0xff] %vm141, %v128
  %190 = vst.msk [vmem:[%s152 + $0x41] sm:$0xff] %vm141, %v129
  %191 = vst.msk [vmem:[%s152 + $0x51] sm:$0xff] %vm141, %v130
  %192 = vst.msk [vmem:[%s152 + $0x61] sm:$0xff] %vm141, %v131
  %193 = vst.msk [vmem:[%s152 + $0x71] sm:$0xff] %vm141, %v132
  %194 = vst.msk [vmem:[%s152 + $0xa1] sm:$0xff] %vm141, %v133
  %195 = vst.msk [vmem:[%s152 + $0xb1] sm:$0xff] %vm141, %v134
  %196 = vst.msk [vmem:[%s152 + $0xc1] sm:$0xff] %vm141, %v135
  %197 = vst.msk [vmem:[%s152 + $0xd1] sm:$0xff] %vm141, %v136
  %198 = vst.msk [vmem:[%s152 + $0xe1] sm:$0xff] %vm141, %v137
  %199 = vst.msk [vmem:[%s152 + $0xf1] sm:$0xff] %vm141, %v138
  %200 = vst.msk [vmem:[%s152 + $0x101] sm:$0xff] %vm141, %v139
  %201 = vst.msk [vmem:[%s152 + $0x111] sm:$0xff] %vm141, %v140
  %v202 = vld [vmem:[#allocation2] sm:$0xff]
  %v203 = vld [vmem:[#allocation2 + $0x10] sm:$0xff]
  %v204 = vld [vmem:[#allocation2 + $0x20] sm:$0xff]
  %v205 = vld [vmem:[#allocation2 + $0x30] sm:$0xff]
  %v206 = vld [vmem:[#allocation2 + $0x40] sm:$0xff]
  %v207 = vld [vmem:[#allocation2 + $0x50] sm:$0xff]
  %v208 = vld [vmem:[#allocation2 + $0x60] sm:$0xff]
  %v209 = vld [vmem:[#allocation2 + $0x70] sm:$0xff]
  %v210 = vld [vmem:[#allocation2 + $0xa0] sm:$0xff]
  %v211 = vld [vmem:[#allocation2 + $0xb0] sm:$0xff]
  %v212 = vld [vmem:[#allocation2 + $0xc0] sm:$0xff]
  %v213 = vld [vmem:[#allocation2 + $0xd0] sm:$0xff]
  %v214 = vld [vmem:[#allocation2 + $0xe0] sm:$0xff]
  %v215 = vld [vmem:[#allocation2 + $0xf0] sm:$0xff]
  %v216 = vld [vmem:[#allocation2 + $0x100] sm:$0xff]
  %v217 = vld [vmem:[#allocation2 + $0x110] sm:$0xff]
  %218 = vst.msk [vmem:[#allocation4] sm:$0xff] %vm141, %v202
  %219 = vst.msk [vmem:[#allocation4 + $0x8] sm:$0xff] %vm141, %v203
  %220 = vst.msk [vmem:[#allocation4 + $0x10] sm:$0xff] %vm141, %v204
  %221 = vst.msk [vmem:[#allocation4 + $0x18] sm:$0xff] %vm141, %v205
  %222 = vst.msk [vmem:[#allocation4 + $0x20] sm:$0xff] %vm141, %v206
  %223 = vst.msk [vmem:[#allocation4 + $0x28] sm:$0xff] %vm141, %v207
  %224 = vst.msk [vmem:[#allocation4 + $0x30] sm:$0xff] %vm141, %v208
  %225 = vst.msk [vmem:[#allocation4 + $0x38] sm:$0xff] %vm141, %v209
  %226 = vst.msk [vmem:[#allocation4 + $0x40] sm:$0xff] %vm141, %v210
  %227 = vst.msk [vmem:[#allocation4 + $0x48] sm:$0xff] %vm141, %v211
  %228 = vst.msk [vmem:[#allocation4 + $0x50] sm:$0xff] %vm141, %v212
  %229 = vst.msk [vmem:[#allocation4 + $0x58] sm:$0xff] %vm141, %v213
  %230 = vst.msk [vmem:[#allocation4 + $0x60] sm:$0xff] %vm141, %v214
  %231 = vst.msk [vmem:[#allocation4 + $0x68] sm:$0xff] %vm141, %v215
  %232 = vst.msk [vmem:[#allocation4 + $0x70] sm:$0xff] %vm141, %v216
  %233 = vst.msk [vmem:[#allocation4 + $0x78] sm:$0xff] %vm141, %v217
  %v234 = vld [vmem:[#allocation2 + $0x1] sm:$0xff]
  %v235 = vld [vmem:[#allocation2 + $0x11] sm:$0xff]
  %v236 = vld [vmem:[#allocation2 + $0x21] sm:$0xff]
  %v237 = vld [vmem:[#allocation2 + $0x31] sm:$0xff]
  %v238 = vld [vmem:[#allocation2 + $0x41] sm:$0xff]
  %v239 = vld [vmem:[#allocation2 + $0x51] sm:$0xff]
  %v240 = vld [vmem:[#allocation2 + $0x61] sm:$0xff]
  %v241 = vld [vmem:[#allocation2 + $0x71] sm:$0xff]
  %v242 = vld [vmem:[#allocation2 + $0xa1] sm:$0xff]
  %v243 = vld [vmem:[#allocation2 + $0xb1] sm:$0xff]
  %v244 = vld [vmem:[#allocation2 + $0xc1] sm:$0xff]
  %v245 = vld [vmem:[#allocation2 + $0xd1] sm:$0xff]
  %v246 = vld [vmem:[#allocation2 + $0xe1] sm:$0xff]
  %v247 = vld [vmem:[#allocation2 + $0xf1] sm:$0xff]
  %v248 = vld [vmem:[#allocation2 + $0x101] sm:$0xff]
  %v249 = vld [vmem:[#allocation2 + $0x111] sm:$0xff]
  %266 = vrot.lane.b32.xlu0 %v234, 4
  %v267 = vpop.permute.xlu0 %266
  %268 = vrot.lane.b32.xlu0 %v235, 4
  %v269 = vpop.permute.xlu0 %268
  %270 = vrot.lane.b32.xlu0 %v236, 4
  %v271 = vpop.permute.xlu0 %270
  %272 = vrot.lane.b32.xlu0 %v237, 4
  %v273 = vpop.permute.xlu0 %272
  %274 = vrot.lane.b32.xlu0 %v238, 4
  %v275 = vpop.permute.xlu0 %274
  %276 = vrot.lane.b32.xlu0 %v239, 4
  %v277 = vpop.permute.xlu0 %276
  %278 = vrot.lane.b32.xlu0 %v240, 4
  %v279 = vpop.permute.xlu0 %278
  %280 = vrot.lane.b32.xlu0 %v241, 4
  %v281 = vpop.permute.xlu0 %280
  %282 = vrot.lane.b32.xlu0 %v242, 4
  %v283 = vpop.permute.xlu0 %282
  %284 = vrot.lane.b32.xlu0 %v243, 4
  %v285 = vpop.permute.xlu0 %284
  %286 = vrot.lane.b32.xlu0 %v244, 4
  %v287 = vpop.permute.xlu0 %286
  %288 = vrot.lane.b32.xlu0 %v245, 4
  %v289 = vpop.permute.xlu0 %288
  %290 = vrot.lane.b32.xlu0 %v246, 4
  %v291 = vpop.permute.xlu0 %290
  %292 = vrot.lane.b32.xlu0 %v247, 4
  %v293 = vpop.permute.xlu0 %292
  %294 = vrot.lane.b32.xlu0 %v248, 4
  %v295 = vpop.permute.xlu0 %294
  %296 = vrot.lane.b32.xlu0 %v249, 4
  %v297 = vpop.permute.xlu0 %296
  %vm314 = vcmask 64544
  %315 = vst.msk [vmem:[#allocation4] sm:$0xff] %vm314, %v267
  %316 = vst.msk [vmem:[#allocation4 + $0x8] sm:$0xff] %vm314, %v269
  %317 = vst.msk [vmem:[#allocation4 + $0x10] sm:$0xff] %vm314, %v271
  %318 = vst.msk [vmem:[#allocation4 + $0x18] sm:$0xff] %vm314, %v273
  %319 = vst.msk [vmem:[#allocation4 + $0x20] sm:$0xff] %vm314, %v275
  %320 = vst.msk [vmem:[#allocation4 + $0x28] sm:$0xff] %vm314, %v277
  %321 = vst.msk [vmem:[#allocation4 + $0x30] sm:$0xff] %vm314, %v279
  %322 = vst.msk [vmem:[#allocation4 + $0x38] sm:$0xff] %vm314, %v281
  %323 = vst.msk [vmem:[#allocation4 + $0x40] sm:$0xff] %vm314, %v283
  %324 = vst.msk [vmem:[#allocation4 + $0x48] sm:$0xff] %vm314, %v285
  %325 = vst.msk [vmem:[#allocation4 + $0x50] sm:$0xff] %vm314, %v287
  %326 = vst.msk [vmem:[#allocation4 + $0x58] sm:$0xff] %vm314, %v289
  %327 = vst.msk [vmem:[#allocation4 + $0x60] sm:$0xff] %vm314, %v291
  %328 = vst.msk [vmem:[#allocation4 + $0x68] sm:$0xff] %vm314, %v293
  %329 = vst.msk [vmem:[#allocation4 + $0x70] sm:$0xff] %vm314, %v295
  %330 = vst.msk [vmem:[#allocation4 + $0x78] sm:$0xff] %vm314, %v297
  %v331 = vld [vmem:[#allocation2 + $0x2] sm:$0xff]
  %v332 = vld [vmem:[#allocation2 + $0x12] sm:$0xff]
  %v333 = vld [vmem:[#allocation2 + $0x22] sm:$0xff]
  %v334 = vld [vmem:[#allocation2 + $0x32] sm:$0xff]
  %v335 = vld [vmem:[#allocation2 + $0x42] sm:$0xff]
  %v336 = vld [vmem:[#allocation2 + $0x52] sm:$0xff]
  %v337 = vld [vmem:[#allocation2 + $0x62] sm:$0xff]
  %v338 = vld [vmem:[#allocation2 + $0x72] sm:$0xff]
  %v339 = vld [vmem:[#allocation2 + $0xa2] sm:$0xff]
  %v340 = vld [vmem:[#allocation2 + $0xb2] sm:$0xff]
  %v341 = vld [vmem:[#allocation2 + $0xc2] sm:$0xff]
  %v342 = vld [vmem:[#allocation2 + $0xd2] sm:$0xff]
  %v343 = vld [vmem:[#allocation2 + $0xe2] sm:$0xff]
  %v344 = vld [vmem:[#allocation2 + $0xf2] sm:$0xff]
  %v345 = vld [vmem:[#allocation2 + $0x102] sm:$0xff]
  %v346 = vld [vmem:[#allocation2 + $0x112] sm:$0xff]
  %363 = vrot.lane.b32.xlu0 %v331, 8
  %v364 = vpop.permute.xlu0 %363
  %365 = vrot.lane.b32.xlu0 %v332, 8
  %v366 = vpop.permute.xlu0 %365
  %367 = vrot.lane.b32.xlu0 %v333, 8
  %v368 = vpop.permute.xlu0 %367
  %369 = vrot.lane.b32.xlu0 %v334, 8
  %v370 = vpop.permute.xlu0 %369
  %371 = vrot.lane.b32.xlu0 %v335, 8
  %v372 = vpop.permute.xlu0 %371
  %373 = vrot.lane.b32.xlu0 %v336, 8
  %v374 = vpop.permute.xlu0 %373
  %375 = vrot.lane.b32.xlu0 %v337, 8
  %v376 = vpop.permute.xlu0 %375
  %377 = vrot.lane.b32.xlu0 %v338, 8
  %v378 = vpop.permute.xlu0 %377
  %379 = vrot.lane.b32.xlu0 %v339, 8
  %v380 = vpop.permute.xlu0 %379
  %381 = vrot.lane.b32.xlu0 %v340, 8
  %v382 = vpop.permute.xlu0 %381
  %383 = vrot.lane.b32.xlu0 %v341, 8
  %v384 = vpop.permute.xlu0 %383
  %385 = vrot.lane.b32.xlu0 %v342, 8
  %v386 = vpop.permute.xlu0 %385
  %387 = vrot.lane.b32.xlu0 %v343, 8
  %v388 = vpop.permute.xlu0 %387
  %389 = vrot.lane.b32.xlu0 %v344, 8
  %v390 = vpop.permute.xlu0 %389
  %391 = vrot.lane.b32.xlu0 %v345, 8
  %v392 = vpop.permute.xlu0 %391
  %393 = vrot.lane.b32.xlu0 %v346, 8
  %v394 = vpop.permute.xlu0 %393
  %vm411 = vcmask 97344
  %412 = vst.msk [vmem:[#allocation4] sm:$0xff] %vm411, %v364
  %413 = vst.msk [vmem:[#allocation4 + $0x8] sm:$0xff] %vm411, %v366
  %414 = vst.msk [vmem:[#allocation4 + $0x10] sm:$0xff] %vm411, %v368
  %415 = vst.msk [vmem:[#allocation4 + $0x18] sm:$0xff] %vm411, %v370
  %416 = vst.msk [vmem:[#allocation4 + $0x20] sm:$0xff] %vm411, %v372
  %417 = vst.msk [vmem:[#allocation4 + $0x28] sm:$0xff] %vm411, %v374
  %418 = vst.msk [vmem:[#allocation4 + $0x30] sm:$0xff] %vm411, %v376
  %419 = vst.msk [vmem:[#allocation4 + $0x38] sm:$0xff] %vm411, %v378
  %420 = vst.msk [vmem:[#allocation4 + $0x40] sm:$0xff] %vm411, %v380
  %421 = vst.msk [vmem:[#allocation4 + $0x48] sm:$0xff] %vm411, %v382
  %422 = vst.msk [vmem:[#allocation4 + $0x50] sm:$0xff] %vm411, %v384
  %423 = vst.msk [vmem:[#allocation4 + $0x58] sm:$0xff] %vm411, %v386
  %424 = vst.msk [vmem:[#allocation4 + $0x60] sm:$0xff] %vm411, %v388
  %425 = vst.msk [vmem:[#allocation4 + $0x68] sm:$0xff] %vm411, %v390
  %426 = vst.msk [vmem:[#allocation4 + $0x70] sm:$0xff] %vm411, %v392
  %427 = vst.msk [vmem:[#allocation4 + $0x78] sm:$0xff] %vm411, %v394
  %v428 = vld [vmem:[%s152] sm:$0xff]
  %v429 = vld [vmem:[%s152 + $0x10] sm:$0xff]
  %v430 = vld [vmem:[%s152 + $0x20] sm:$0xff]
  %v431 = vld [vmem:[%s152 + $0x30] sm:$0xff]
  %v432 = vld [vmem:[%s152 + $0x40] sm:$0xff]
  %v433 = vld [vmem:[%s152 + $0x50] sm:$0xff]
  %v434 = vld [vmem:[%s152 + $0x60] sm:$0xff]
  %v435 = vld [vmem:[%s152 + $0x70] sm:$0xff]
  %v436 = vld [vmem:[%s152 + $0xa0] sm:$0xff]
  %v437 = vld [vmem:[%s152 + $0xb0] sm:$0xff]
  %v438 = vld [vmem:[%s152 + $0xc0] sm:$0xff]
  %v439 = vld [vmem:[%s152 + $0xd0] sm:$0xff]
  %v440 = vld [vmem:[%s152 + $0xe0] sm:$0xff]
  %v441 = vld [vmem:[%s152 + $0xf0] sm:$0xff]
  %v442 = vld [vmem:[%s152 + $0x100] sm:$0xff]
  %v443 = vld [vmem:[%s152 + $0x110] sm:$0xff]
  %460 = vrot.lane.b32.xlu0 %v428, 12
  %v461 = vpop.permute.xlu0 %460
  %462 = vrot.lane.b32.xlu0 %v429, 12
  %v463 = vpop.permute.xlu0 %462
  %464 = vrot.lane.b32.xlu0 %v430, 12
  %v465 = vpop.permute.xlu0 %464
  %466 = vrot.lane.b32.xlu0 %v431, 12
  %v467 = vpop.permute.xlu0 %466
  %468 = vrot.lane.b32.xlu0 %v432, 12
  %v469 = vpop.permute.xlu0 %468
  %470 = vrot.lane.b32.xlu0 %v433, 12
  %v471 = vpop.permute.xlu0 %470
  %472 = vrot.lane.b32.xlu0 %v434, 12
  %v473 = vpop.permute.xlu0 %472
  %474 = vrot.lane.b32.xlu0 %v435, 12
  %v475 = vpop.permute.xlu0 %474
  %476 = vrot.lane.b32.xlu0 %v436, 12
  %v477 = vpop.permute.xlu0 %476
  %478 = vrot.lane.b32.xlu0 %v437, 12
  %v479 = vpop.permute.xlu0 %478
  %480 = vrot.lane.b32.xlu0 %v438, 12
  %v481 = vpop.permute.xlu0 %480
  %482 = vrot.lane.b32.xlu0 %v439, 12
  %v483 = vpop.permute.xlu0 %482
  %484 = vrot.lane.b32.xlu0 %v440, 12
  %v485 = vpop.permute.xlu0 %484
  %486 = vrot.lane.b32.xlu0 %v441, 12
  %v487 = vpop.permute.xlu0 %486
  %488 = vrot.lane.b32.xlu0 %v442, 12
  %v489 = vpop.permute.xlu0 %488
  %490 = vrot.lane.b32.xlu0 %v443, 12
  %v491 = vpop.permute.xlu0 %490
  %vm508 = vcmask 130144
  %509 = vst.msk [vmem:[#allocation4] sm:$0xff] %vm508, %v461
  %510 = vst.msk [vmem:[#allocation4 + $0x8] sm:$0xff] %vm508, %v463
  %511 = vst.msk [vmem:[#allocation4 + $0x10] sm:$0xff] %vm508, %v465
  %512 = vst.msk [vmem:[#allocation4 + $0x18] sm:$0xff] %vm508, %v467
  %513 = vst.msk [vmem:[#allocation4 + $0x20] sm:$0xff] %vm508, %v469
  %514 = vst.msk [vmem:[#allocation4 + $0x28] sm:$0xff] %vm508, %v471
  %515 = vst.msk [vmem:[#allocation4 + $0x30] sm:$0xff] %vm508, %v473
  %516 = vst.msk [vmem:[#allocation4 + $0x38] sm:$0xff] %vm508, %v475
  %517 = vst.msk [vmem:[#allocation4 + $0x40] sm:$0xff] %vm508, %v477
  %518 = vst.msk [vmem:[#allocation4 + $0x48] sm:$0xff] %vm508, %v479
  %519 = vst.msk [vmem:[#allocation4 + $0x50] sm:$0xff] %vm508, %v481
  %520 = vst.msk [vmem:[#allocation4 + $0x58] sm:$0xff] %vm508, %v483
  %521 = vst.msk [vmem:[#allocation4 + $0x60] sm:$0xff] %vm508, %v485
  %522 = vst.msk [vmem:[#allocation4 + $0x68] sm:$0xff] %vm508, %v487
  %523 = vst.msk [vmem:[#allocation4 + $0x70] sm:$0xff] %vm508, %v489
  %524 = vst.msk [vmem:[#allocation4 + $0x78] sm:$0xff] %vm508, %v491
  %v525 = vld [vmem:[%s152 + $0x1] sm:$0xff]
  %v526 = vld [vmem:[%s152 + $0x11] sm:$0xff]
  %v527 = vld [vmem:[%s152 + $0x21] sm:$0xff]
  %v528 = vld [vmem:[%s152 + $0x31] sm:$0xff]
  %v529 = vld [vmem:[%s152 + $0x41] sm:$0xff]
  %v530 = vld [vmem:[%s152 + $0x51] sm:$0xff]
  %v531 = vld [vmem:[%s152 + $0x61] sm:$0xff]
  %v532 = vld [vmem:[%s152 + $0x71] sm:$0xff]
  %v533 = vld [vmem:[%s152 + $0xa1] sm:$0xff]
  %v534 = vld [vmem:[%s152 + $0xb1] sm:$0xff]
  %v535 = vld [vmem:[%s152 + $0xc1] sm:$0xff]
  %v536 = vld [vmem:[%s152 + $0xd1] sm:$0xff]
  %v537 = vld [vmem:[%s152 + $0xe1] sm:$0xff]
  %v538 = vld [vmem:[%s152 + $0xf1] sm:$0xff]
  %v539 = vld [vmem:[%s152 + $0x101] sm:$0xff]
  %v540 = vld [vmem:[%s152 + $0x111] sm:$0xff]
  %557 = vrot.lane.b32.xlu0 %v525, 16
  %v558 = vpop.permute.xlu0 %557
  %559 = vrot.lane.b32.xlu0 %v526, 16
  %v560 = vpop.permute.xlu0 %559
  %561 = vrot.lane.b32.xlu0 %v527, 16
  %v562 = vpop.permute.xlu0 %561
  %563 = vrot.lane.b32.xlu0 %v528, 16
  %v564 = vpop.permute.xlu0 %563
  %565 = vrot.lane.b32.xlu0 %v529, 16
  %v566 = vpop.permute.xlu0 %565
  %567 = vrot.lane.b32.xlu0 %v530, 16
  %v568 = vpop.permute.xlu0 %567
  %569 = vrot.lane.b32.xlu0 %v531, 16
  %v570 = vpop.permute.xlu0 %569
  %571 = vrot.lane.b32.xlu0 %v532, 16
  %v572 = vpop.permute.xlu0 %571
  %573 = vrot.lane.b32.xlu0 %v533, 16
  %v574 = vpop.permute.xlu0 %573
  %575 = vrot.lane.b32.xlu0 %v534, 16
  %v576 = vpop.permute.xlu0 %575
  %577 = vrot.lane.b32.xlu0 %v535, 16
  %v578 = vpop.permute.xlu0 %577
  %579 = vrot.lane.b32.xlu0 %v536, 16
  %v580 = vpop.permute.xlu0 %579
  %581 = vrot.lane.b32.xlu0 %v537, 16
  %v582 = vpop.permute.xlu0 %581
  %583 = vrot.lane.b32.xlu0 %v538, 16
  %v584 = vpop.permute.xlu0 %583
  %585 = vrot.lane.b32.xlu0 %v539, 16
  %v586 = vpop.permute.xlu0 %585
  %587 = vrot.lane.b32.xlu0 %v540, 16
  %v588 = vpop.permute.xlu0 %587
  %vm605 = vcmask 162944
  %606 = vst.msk [vmem:[#allocation4] sm:$0xff] %vm605, %v558
  %607 = vst.msk [vmem:[#allocation4 + $0x8] sm:$0xff] %vm605, %v560
  %608 = vst.msk [vmem:[#allocation4 + $0x10] sm:$0xff] %vm605, %v562
  %609 = vst.msk [vmem:[#allocation4 + $0x18] sm:$0xff] %vm605, %v564
  %610 = vst.msk [vmem:[#allocation4 + $0x20] sm:$0xff] %vm605, %v566
  %611 = vst.msk [vmem:[#allocation4 + $0x28] sm:$0xff] %vm605, %v568
  %612 = vst.msk [vmem:[#allocation4 + $0x30] sm:$0xff] %vm605, %v570
  %613 = vst.msk [vmem:[#allocation4 + $0x38] sm:$0xff] %vm605, %v572
  %614 = vst.msk [vmem:[#allocation4 + $0x40] sm:$0xff] %vm605, %v574
  %615 = vst.msk [vmem:[#allocation4 + $0x48] sm:$0xff] %vm605, %v576
  %616 = vst.msk [vmem:[#allocation4 + $0x50] sm:$0xff] %vm605, %v578
  %617 = vst.msk [vmem:[#allocation4 + $0x58] sm:$0xff] %vm605, %v580
  %618 = vst.msk [vmem:[#allocation4 + $0x60] sm:$0xff] %vm605, %v582
  %619 = vst.msk [vmem:[#allocation4 + $0x68] sm:$0xff] %vm605, %v584
  %620 = vst.msk [vmem:[#allocation4 + $0x70] sm:$0xff] %vm605, %v586
  %621 = vst.msk [vmem:[#allocation4 + $0x78] sm:$0xff] %vm605, %v588
  %v622 = vld [vmem:[%s152 + $0x2] sm:$0xff]
  %v623 = vld [vmem:[%s152 + $0x12] sm:$0xff]
  %v624 = vld [vmem:[%s152 + $0x22] sm:$0xff]
  %v625 = vld [vmem:[%s152 + $0x32] sm:$0xff]
  %v626 = vld [vmem:[%s152 + $0x42] sm:$0xff]
  %v627 = vld [vmem:[%s152 + $0x52] sm:$0xff]
  %v628 = vld [vmem:[%s152 + $0x62] sm:$0xff]
  %v629 = vld [vmem:[%s152 + $0x72] sm:$0xff]
  %v630 = vld [vmem:[%s152 + $0xa2] sm:$0xff]
  %v631 = vld [vmem:[%s152 + $0xb2] sm:$0xff]
  %v632 = vld [vmem:[%s152 + $0xc2] sm:$0xff]
  %v633 = vld [vmem:[%s152 + $0xd2] sm:$0xff]
  %v634 = vld [vmem:[%s152 + $0xe2] sm:$0xff]
  %v635 = vld [vmem:[%s152 + $0xf2] sm:$0xff]
  %v636 = vld [vmem:[%s152 + $0x102] sm:$0xff]
  %v637 = vld [vmem:[%s152 + $0x112] sm:$0xff]
  %654 = vrot.lane.b32.xlu0 %v622, 20
  %v655 = vpop.permute.xlu0 %654
  %656 = vrot.lane.b32.xlu0 %v623, 20
  %v657 = vpop.permute.xlu0 %656
  %658 = vrot.lane.b32.xlu0 %v624, 20
  %v659 = vpop.permute.xlu0 %658
  %660 = vrot.lane.b32.xlu0 %v625, 20
  %v661 = vpop.permute.xlu0 %660
  %662 = vrot.lane.b32.xlu0 %v626, 20
  %v663 = vpop.permute.xlu0 %662
  %664 = vrot.lane.b32.xlu0 %v627, 20
  %v665 = vpop.permute.xlu0 %664
  %666 = vrot.lane.b32.xlu0 %v628, 20
  %v667 = vpop.permute.xlu0 %666
  %668 = vrot.lane.b32.xlu0 %v629, 20
  %v669 = vpop.permute.xlu0 %668
  %670 = vrot.lane.b32.xlu0 %v630, 20
  %v671 = vpop.permute.xlu0 %670
  %672 = vrot.lane.b32.xlu0 %v631, 20
  %v673 = vpop.permute.xlu0 %672
  %674 = vrot.lane.b32.xlu0 %v632, 20
  %v675 = vpop.permute.xlu0 %674
  %676 = vrot.lane.b32.xlu0 %v633, 20
  %v677 = vpop.permute.xlu0 %676
  %678 = vrot.lane.b32.xlu0 %v634, 20
  %v679 = vpop.permute.xlu0 %678
  %680 = vrot.lane.b32.xlu0 %v635, 20
  %v681 = vpop.permute.xlu0 %680
  %682 = vrot.lane.b32.xlu0 %v636, 20
  %v683 = vpop.permute.xlu0 %682
  %684 = vrot.lane.b32.xlu0 %v637, 20
  %v685 = vpop.permute.xlu0 %684
  %vm702 = vcmask 195744
  %703 = vst.msk [vmem:[#allocation4] sm:$0xff] %vm702, %v655
  %704 = vst.msk [vmem:[#allocation4 + $0x8] sm:$0xff] %vm702, %v657
  %705 = vst.msk [vmem:[#allocation4 + $0x10] sm:$0xff] %vm702, %v659
  %706 = vst.msk [vmem:[#allocation4 + $0x18] sm:$0xff] %vm702, %v661
  %707 = vst.msk [vmem:[#allocation4 + $0x20] sm:$0xff] %vm702, %v663
  %708 = vst.msk [vmem:[#allocation4 + $0x28] sm:$0xff] %vm702, %v665
  %709 = vst.msk [vmem:[#allocation4 + $0x30] sm:$0xff] %vm702, %v667
  %710 = vst.msk [vmem:[#allocation4 + $0x38] sm:$0xff] %vm702, %v669
  %711 = vst.msk [vmem:[#allocation4 + $0x40] sm:$0xff] %vm702, %v671
  %712 = vst.msk [vmem:[#allocation4 + $0x48] sm:$0xff] %vm702, %v673
  %713 = vst.msk [vmem:[#allocation4 + $0x50] sm:$0xff] %vm702, %v675
  %714 = vst.msk [vmem:[#allocation4 + $0x58] sm:$0xff] %vm702, %v677
  %715 = vst.msk [vmem:[#allocation4 + $0x60] sm:$0xff] %vm702, %v679
  %716 = vst.msk [vmem:[#allocation4 + $0x68] sm:$0xff] %vm702, %v681
  %717 = vst.msk [vmem:[#allocation4 + $0x70] sm:$0xff] %vm702, %v683
  %718 = vst.msk [vmem:[#allocation4 + $0x78] sm:$0xff] %vm702, %v685
  %s719 = scalar_lea.vmem [#allocation2], 32
  %v720 = vld [vmem:[%s719] sm:$0xff]
  %v721 = vld [vmem:[%s719 + $0x10] sm:$0xff]
  %v722 = vld [vmem:[%s719 + $0x20] sm:$0xff]
  %v723 = vld [vmem:[%s719 + $0x30] sm:$0xff]
  %v724 = vld [vmem:[%s719 + $0x40] sm:$0xff]
  %v725 = vld [vmem:[%s719 + $0x50] sm:$0xff]
  %v726 = vld [vmem:[%s719 + $0x60] sm:$0xff]
  %v727 = vld [vmem:[%s719 + $0x70] sm:$0xff]
  %v728 = vld [vmem:[%s719 + $0xa0] sm:$0xff]
  %v729 = vld [vmem:[%s719 + $0xb0] sm:$0xff]
  %v730 = vld [vmem:[%s719 + $0xc0] sm:$0xff]
  %v731 = vld [vmem:[%s719 + $0xd0] sm:$0xff]
  %v732 = vld [vmem:[%s719 + $0xe0] sm:$0xff]
  %v733 = vld [vmem:[%s719 + $0xf0] sm:$0xff]
  %v734 = vld [vmem:[%s719 + $0x100] sm:$0xff]
  %v735 = vld [vmem:[%s719 + $0x110] sm:$0xff]
  %752 = vrot.lane.b32.xlu0 %v720, 24
  %v753 = vpop.permute.xlu0 %752
  %754 = vrot.lane.b32.xlu0 %v721, 24
  %v755 = vpop.permute.xlu0 %754
  %756 = vrot.lane.b32.xlu0 %v722, 24
  %v757 = vpop.permute.xlu0 %756
  %758 = vrot.lane.b32.xlu0 %v723, 24
  %v759 = vpop.permute.xlu0 %758
  %760 = vrot.lane.b32.xlu0 %v724, 24
  %v761 = vpop.permute.xlu0 %760
  %762 = vrot.lane.b32.xlu0 %v725, 24
  %v763 = vpop.permute.xlu0 %762
  %764 = vrot.lane.b32.xlu0 %v726, 24
  %v765 = vpop.permute.xlu0 %764
  %766 = vrot.lane.b32.xlu0 %v727, 24
  %v767 = vpop.permute.xlu0 %766
  %768 = vrot.lane.b32.xlu0 %v728, 24
  %v769 = vpop.permute.xlu0 %768
  %770 = vrot.lane.b32.xlu0 %v729, 24
  %v771 = vpop.permute.xlu0 %770
  %772 = vrot.lane.b32.xlu0 %v730, 24
  %v773 = vpop.permute.xlu0 %772
  %774 = vrot.lane.b32.xlu0 %v731, 24
  %v775 = vpop.permute.xlu0 %774
  %776 = vrot.lane.b32.xlu0 %v732, 24
  %v777 = vpop.permute.xlu0 %776
  %778 = vrot.lane.b32.xlu0 %v733, 24
  %v779 = vpop.permute.xlu0 %778
  %780 = vrot.lane.b32.xlu0 %v734, 24
  %v781 = vpop.permute.xlu0 %780
  %782 = vrot.lane.b32.xlu0 %v735, 24
  %v783 = vpop.permute.xlu0 %782
  %vm800 = vcmask 228544
  %801 = vst.msk [vmem:[#allocation4] sm:$0xff] %vm800, %v753
  %802 = vst.msk [vmem:[#allocation4 + $0x8] sm:$0xff] %vm800, %v755
  %803 = vst.msk [vmem:[#allocation4 + $0x10] sm:$0xff] %vm800, %v757
  %804 = vst.msk [vmem:[#allocation4 + $0x18] sm:$0xff] %vm800, %v759
  %805 = vst.msk [vmem:[#allocation4 + $0x20] sm:$0xff] %vm800, %v761
  %806 = vst.msk [vmem:[#allocation4 + $0x28] sm:$0xff] %vm800, %v763
  %807 = vst.msk [vmem:[#allocation4 + $0x30] sm:$0xff] %vm800, %v765
  %808 = vst.msk [vmem:[#allocation4 + $0x38] sm:$0xff] %vm800, %v767
  %809 = vst.msk [vmem:[#allocation4 + $0x40] sm:$0xff] %vm800, %v769
  %810 = vst.msk [vmem:[#allocation4 + $0x48] sm:$0xff] %vm800, %v771
  %811 = vst.msk [vmem:[#allocation4 + $0x50] sm:$0xff] %vm800, %v773
  %812 = vst.msk [vmem:[#allocation4 + $0x58] sm:$0xff] %vm800, %v775
  %813 = vst.msk [vmem:[#allocation4 + $0x60] sm:$0xff] %vm800, %v777
  %814 = vst.msk [vmem:[#allocation4 + $0x68] sm:$0xff] %vm800, %v779
  %815 = vst.msk [vmem:[#allocation4 + $0x70] sm:$0xff] %vm800, %v781
  %816 = vst.msk [vmem:[#allocation4 + $0x78] sm:$0xff] %vm800, %v783
  %v817 = vld [vmem:[%s719 + $0x1] sm:$0xff]
  %v818 = vld [vmem:[%s719 + $0x11] sm:$0xff]
  %v819 = vld [vmem:[%s719 + $0x21] sm:$0xff]
  %v820 = vld [vmem:[%s719 + $0x31] sm:$0xff]
  %v821 = vld [vmem:[%s719 + $0x41] sm:$0xff]
  %v822 = vld [vmem:[%s719 + $0x51] sm:$0xff]
  %v823 = vld [vmem:[%s719 + $0x61] sm:$0xff]
  %v824 = vld [vmem:[%s719 + $0x71] sm:$0xff]
  %v825 = vld [vmem:[%s719 + $0xa1] sm:$0xff]
  %v826 = vld [vmem:[%s719 + $0xb1] sm:$0xff]
  %v827 = vld [vmem:[%s719 + $0xc1] sm:$0xff]
  %v828 = vld [vmem:[%s719 + $0xd1] sm:$0xff]
  %v829 = vld [vmem:[%s719 + $0xe1] sm:$0xff]
  %v830 = vld [vmem:[%s719 + $0xf1] sm:$0xff]
  %v831 = vld [vmem:[%s719 + $0x101] sm:$0xff]
  %v832 = vld [vmem:[%s719 + $0x111] sm:$0xff]
  %849 = vrot.lane.b32.xlu0 %v817, 28
  %v850 = vpop.permute.xlu0 %849
  %851 = vrot.lane.b32.xlu0 %v818, 28
  %v852 = vpop.permute.xlu0 %851
  %853 = vrot.lane.b32.xlu0 %v819, 28
  %v854 = vpop.permute.xlu0 %853
  %855 = vrot.lane.b32.xlu0 %v820, 28
  %v856 = vpop.permute.xlu0 %855
  %857 = vrot.lane.b32.xlu0 %v821, 28
  %v858 = vpop.permute.xlu0 %857
  %859 = vrot.lane.b32.xlu0 %v822, 28
  %v860 = vpop.permute.xlu0 %859
  %861 = vrot.lane.b32.xlu0 %v823, 28
  %v862 = vpop.permute.xlu0 %861
  %863 = vrot.lane.b32.xlu0 %v824, 28
  %v864 = vpop.permute.xlu0 %863
  %865 = vrot.lane.b32.xlu0 %v825, 28
  %v866 = vpop.permute.xlu0 %865
  %867 = vrot.lane.b32.xlu0 %v826, 28
  %v868 = vpop.permute.xlu0 %867
  %869 = vrot.lane.b32.xlu0 %v827, 28
  %v870 = vpop.permute.xlu0 %869
  %871 = vrot.lane.b32.xlu0 %v828, 28
  %v872 = vpop.permute.xlu0 %871
  %873 = vrot.lane.b32.xlu0 %v829, 28
  %v874 = vpop.permute.xlu0 %873
  %875 = vrot.lane.b32.xlu0 %v830, 28
  %v876 = vpop.permute.xlu0 %875
  %877 = vrot.lane.b32.xlu0 %v831, 28
  %v878 = vpop.permute.xlu0 %877
  %879 = vrot.lane.b32.xlu0 %v832, 28
  %v880 = vpop.permute.xlu0 %879
  %vm897 = vcmask 261344
  %898 = vst.msk [vmem:[#allocation4] sm:$0xff] %vm897, %v850
  %899 = vst.msk [vmem:[#allocation4 + $0x8] sm:$0xff] %vm897, %v852
  %900 = vst.msk [vmem:[#allocation4 + $0x10] sm:$0xff] %vm897, %v854
  %901 = vst.msk [vmem:[#allocation4 + $0x18] sm:$0xff] %vm897, %v856
  %902 = vst.msk [vmem:[#allocation4 + $0x20] sm:$0xff] %vm897, %v858
  %903 = vst.msk [vmem:[#allocation4 + $0x28] sm:$0xff] %vm897, %v860
  %904 = vst.msk [vmem:[#allocation4 + $0x30] sm:$0xff] %vm897, %v862
  %905 = vst.msk [vmem:[#allocation4 + $0x38] sm:$0xff] %vm897, %v864
  %906 = vst.msk [vmem:[#allocation4 + $0x40] sm:$0xff] %vm897, %v866
  %907 = vst.msk [vmem:[#allocation4 + $0x48] sm:$0xff] %vm897, %v868
  %908 = vst.msk [vmem:[#allocation4 + $0x50] sm:$0xff] %vm897, %v870
  %909 = vst.msk [vmem:[#allocation4 + $0x58] sm:$0xff] %vm897, %v872
  %910 = vst.msk [vmem:[#allocation4 + $0x60] sm:$0xff] %vm897, %v874
  %911 = vst.msk [vmem:[#allocation4 + $0x68] sm:$0xff] %vm897, %v876
  %912 = vst.msk [vmem:[#allocation4 + $0x70] sm:$0xff] %vm897, %v878
  %913 = vst.msk [vmem:[#allocation4 + $0x78] sm:$0xff] %vm897, %v880
  %v914 = vld [vmem:[%s719 + $0x2] sm:$0xff]
  %v915 = vld [vmem:[%s719 + $0x12] sm:$0xff]
  %v916 = vld [vmem:[%s719 + $0x22] sm:$0xff]
  %v917 = vld [vmem:[%s719 + $0x32] sm:$0xff]
  %v918 = vld [vmem:[%s719 + $0x42] sm:$0xff]
  %v919 = vld [vmem:[%s719 + $0x52] sm:$0xff]
  %v920 = vld [vmem:[%s719 + $0x62] sm:$0xff]
  %v921 = vld [vmem:[%s719 + $0x72] sm:$0xff]
  %v922 = vld [vmem:[%s719 + $0xa2] sm:$0xff]
  %v923 = vld [vmem:[%s719 + $0xb2] sm:$0xff]
  %v924 = vld [vmem:[%s719 + $0xc2] sm:$0xff]
  %v925 = vld [vmem:[%s719 + $0xd2] sm:$0xff]
  %v926 = vld [vmem:[%s719 + $0xe2] sm:$0xff]
  %v927 = vld [vmem:[%s719 + $0xf2] sm:$0xff]
  %v928 = vld [vmem:[%s719 + $0x102] sm:$0xff]
  %v929 = vld [vmem:[%s719 + $0x112] sm:$0xff]
  %946 = vrot.lane.b32.xlu0 %v914, 32
  %v947 = vpop.permute.xlu0 %946
  %948 = vrot.lane.b32.xlu0 %v915, 32
  %v949 = vpop.permute.xlu0 %948
  %950 = vrot.lane.b32.xlu0 %v916, 32
  %v951 = vpop.permute.xlu0 %950
  %952 = vrot.lane.b32.xlu0 %v917, 32
  %v953 = vpop.permute.xlu0 %952
  %954 = vrot.lane.b32.xlu0 %v918, 32
  %v955 = vpop.permute.xlu0 %954
  %956 = vrot.lane.b32.xlu0 %v919, 32
  %v957 = vpop.permute.xlu0 %956
  %958 = vrot.lane.b32.xlu0 %v920, 32
  %v959 = vpop.permute.xlu0 %958
  %960 = vrot.lane.b32.xlu0 %v921, 32
  %v961 = vpop.permute.xlu0 %960
  %962 = vrot.lane.b32.xlu0 %v922, 32
  %v963 = vpop.permute.xlu0 %962
  %964 = vrot.lane.b32.xlu0 %v923, 32
  %v965 = vpop.permute.xlu0 %964
  %966 = vrot.lane.b32.xlu0 %v924, 32
  %v967 = vpop.permute.xlu0 %966
  %968 = vrot.lane.b32.xlu0 %v925, 32
  %v969 = vpop.permute.xlu0 %968
  %970 = vrot.lane.b32.xlu0 %v926, 32
  %v971 = vpop.permute.xlu0 %970
  %972 = vrot.lane.b32.xlu0 %v927, 32
  %v973 = vpop.permute.xlu0 %972
  %974 = vrot.lane.b32.xlu0 %v928, 32
  %v975 = vpop.permute.xlu0 %974
  %976 = vrot.lane.b32.xlu0 %v929, 32
  %v977 = vpop.permute.xlu0 %976
  %vm994 = vcmask 294144
  %995 = vst.msk [vmem:[#allocation4] sm:$0xff] %vm994, %v947
  %996 = vst.msk [vmem:[#allocation4 + $0x8] sm:$0xff] %vm994, %v949
  %997 = vst.msk [vmem:[#allocation4 + $0x10] sm:$0xff] %vm994, %v951
  %998 = vst.msk [vmem:[#allocation4 + $0x18] sm:$0xff] %vm994, %v953
  %999 = vst.msk [vmem:[#allocation4 + $0x20] sm:$0xff] %vm994, %v955
  %1000 = vst.msk [vmem:[#allocation4 + $0x28] sm:$0xff] %vm994, %v957
  %1001 = vst.msk [vmem:[#allocation4 + $0x30] sm:$0xff] %vm994, %v959
  %1002 = vst.msk [vmem:[#allocation4 + $0x38] sm:$0xff] %vm994, %v961
  %1003 = vst.msk [vmem:[#allocation4 + $0x40] sm:$0xff] %vm994, %v963
  %1004 = vst.msk [vmem:[#allocation4 + $0x48] sm:$0xff] %vm994, %v965
  %1005 = vst.msk [vmem:[#allocation4 + $0x50] sm:$0xff] %vm994, %v967
  %1006 = vst.msk [vmem:[#allocation4 + $0x58] sm:$0xff] %vm994, %v969
  %1007 = vst.msk [vmem:[#allocation4 + $0x60] sm:$0xff] %vm994, %v971
  %1008 = vst.msk [vmem:[#allocation4 + $0x68] sm:$0xff] %vm994, %v973
  %1009 = vst.msk [vmem:[#allocation4 + $0x70] sm:$0xff] %vm994, %v975
  %1010 = vst.msk [vmem:[#allocation4 + $0x78] sm:$0xff] %vm994, %v977
  %v1011 = vld [vmem:[#allocation4] sm:$0xff]
  %v1012 = vld [vmem:[#allocation4 + $0x8] sm:$0xff]
  %v1013 = vld [vmem:[#allocation4 + $0x10] sm:$0xff]
  %v1014 = vld [vmem:[#allocation4 + $0x18] sm:$0xff]
  %v1015 = vld [vmem:[#allocation4 + $0x20] sm:$0xff]
  %v1016 = vld [vmem:[#allocation4 + $0x28] sm:$0xff]
  %v1017 = vld [vmem:[#allocation4 + $0x30] sm:$0xff]
  %v1018 = vld [vmem:[#allocation4 + $0x38] sm:$0xff]
  %v1019 = vld [vmem:[#allocation4 + $0x40] sm:$0xff]
  %v1020 = vld [vmem:[#allocation4 + $0x48] sm:$0xff]
  %v1021 = vld [vmem:[#allocation4 + $0x50] sm:$0xff]
  %v1022 = vld [vmem:[#allocation4 + $0x58] sm:$0xff]
  %v1023 = vld [vmem:[#allocation4 + $0x60] sm:$0xff]
  %v1024 = vld [vmem:[#allocation4 + $0x68] sm:$0xff]
  %v1025 = vld [vmem:[#allocation4 + $0x70] sm:$0xff]
  %v1026 = vld [vmem:[#allocation4 + $0x78] sm:$0xff]
  %v1027 = vld [vmem:[%s1] sm:$0xff]
  %v1028 = vld [vmem:[%s1 + $0x8] sm:$0xff]
  %v1029 = vld [vmem:[%s1 + $0x10] sm:$0xff]
  %v1030 = vld [vmem:[%s1 + $0x18] sm:$0xff]
  %v1031 = vld [vmem:[%s1 + $0x20] sm:$0xf]
  %vm1032 = vcmask 293888
  %v1034 = vsel %vm1032, %v1011, 0
  %v1037 = vsel %vm1032, %v1012, 0
  %v1040 = vsel %vm1032, %v1013, 0
  %v1043 = vsel %vm1032, %v1014, 0
  %v1046 = vsel %vm1032, %v1015, 0
  %v1049 = vsel %vm1032, %v1016, 0
  %v1052 = vsel %vm1032, %v1017, 0
  %v1055 = vsel %vm1032, %v1018, 0
  %v1058 = vsel %vm1032, %v1019, 0
  %v1061 = vsel %vm1032, %v1020, 0
  %v1064 = vsel %vm1032, %v1021, 0
  %v1067 = vsel %vm1032, %v1022, 0
  %v1070 = vsel %vm1032, %v1023, 0
  %v1073 = vsel %vm1032, %v1024, 0
  %v1076 = vsel %vm1032, %v1025, 0
  %v1079 = vsel %vm1032, %v1026, 0
  %vm1081 = vcmask 1043456
  %v1083 = vsel %vm1081, %v1031, 0
  %1085 = vmatpush.msra.mxu0 0.0
  %1086 = vmatpush.msra.mxu0 0.0
  %1087 = vmatpush.msra.mxu0 0.0
  %1088 = vmatpush.msra.mxu0 0.0
  %1089 = vmatpush.msra.mxu0 0.0
  %1090 = vmatpush.msra.mxu0 0.0
  %1091 = vmatpush.msra.mxu0 0.0
  %1092 = vmatpush.msra.mxu0 0.0
  %1093 = vmatpush.msra.mxu0 0.0
  %1094 = vmatpush.msra.mxu0 0.0
  %1095 = vmatpush.msra.mxu0 0.0
  %1096 = vmatpush.msra.mxu0 %v1083
  %1097 = vmatpush.msra.mxu0 %v1030
  %1098 = vmatpush.msra.mxu0 %v1029
  %1099 = vmatpush.msra.mxu0 %v1028
  %1100 = vmatpush.msra.mxu0 %v1027
  %1101 = vmatmul.f32.gmra.mxu0 %v1034
  %v1102 = vpop.f32.mrf.mxu0
  %v1103 = vadd.f32 0.0, %v1102
  %1104 = vmatmul.f32.gmra.mxu0 %v1037
  %v1105 = vpop.f32.mrf.mxu0
  %v1106 = vadd.f32 0.0, %v1105
  %1107 = vmatmul.f32.gmra.mxu0 %v1040
  %v1108 = vpop.f32.mrf.mxu0
  %v1109 = vadd.f32 0.0, %v1108
  %1110 = vmatmul.f32.gmra.mxu0 %v1043
  %v1111 = vpop.f32.mrf.mxu0
  %v1112 = vadd.f32 0.0, %v1111
  %1113 = vmatmul.f32.gmra.mxu0 %v1046
  %v1114 = vpop.f32.mrf.mxu0
  %v1115 = vadd.f32 0.0, %v1114
  %1116 = vmatmul.f32.gmra.mxu0 %v1049
  %v1117 = vpop.f32.mrf.mxu0
  %v1118 = vadd.f32 0.0, %v1117
  %1119 = vmatmul.f32.gmra.mxu0 %v1052
  %v1120 = vpop.f32.mrf.mxu0
  %v1121 = vadd.f32 0.0, %v1120
  %1122 = vmatmul.f32.gmra.mxu0 %v1055
  %v1123 = vpop.f32.mrf.mxu0
  %v1124 = vadd.f32 0.0, %v1123
  %1125 = vmatmul.f32.gmra.mxu0 %v1058
  %v1126 = vpop.f32.mrf.mxu0
  %v1127 = vadd.f32 0.0, %v1126
  %1128 = vmatmul.f32.gmra.mxu0 %v1061
  %v1129 = vpop.f32.mrf.mxu0
  %v1130 = vadd.f32 0.0, %v1129
  %1131 = vmatmul.f32.gmra.mxu0 %v1064
  %v1132 = vpop.f32.mrf.mxu0
  %v1133 = vadd.f32 0.0, %v1132
  %1134 = vmatmul.f32.gmra.mxu0 %v1067
  %v1135 = vpop.f32.mrf.mxu0
  %v1136 = vadd.f32 0.0, %v1135
  %1137 = vmatmul.f32.gmra.mxu0 %v1070
  %v1138 = vpop.f32.mrf.mxu0
  %v1139 = vadd.f32 0.0, %v1138
  %1140 = vmatmul.f32.gmra.mxu0 %v1073
  %v1141 = vpop.f32.mrf.mxu0
  %v1142 = vadd.f32 0.0, %v1141
  %1143 = vmatmul.f32.gmra.mxu0 %v1076
  %v1144 = vpop.f32.mrf.mxu0
  %v1145 = vadd.f32 0.0, %v1144
  %1146 = vmatmul.f32.gmra.mxu0 %v1079
  %v1147 = vpop.f32.mrf.mxu0
  %v1148 = vadd.f32 0.0, %v1147
  %1149 = vdwg.mxu0
  %vm1150 = vcmask 130048
  %v1151 = vsel %vm1150, %v1103, 0.0
  %v1152 = vsel %vm1150, %v1106, 0.0
  %v1153 = vadd.f32 %v1151, %v1152
  %v1154 = vsel %vm1150, %v1109, 0.0
  %v1155 = vadd.f32 %v1153, %v1154
  %v1156 = vsel %vm1150, %v1112, 0.0
  %v1157 = vadd.f32 %v1155, %v1156
  %v1158 = vsel %vm1150, %v1115, 0.0
  %v1159 = vadd.f32 %v1157, %v1158
  %v1160 = vsel %vm1150, %v1118, 0.0
  %v1161 = vadd.f32 %v1159, %v1160
  %v1162 = vsel %vm1150, %v1121, 0.0
  %v1163 = vadd.f32 %v1161, %v1162
  %v1164 = vsel %vm1150, %v1124, 0.0
  %v1165 = vadd.f32 %v1163, %v1164
  %v1166 = vsel %vm1150, %v1127, 0.0
  %v1167 = vadd.f32 %v1165, %v1166
  %v1168 = vsel %vm1150, %v1130, 0.0
  %v1169 = vadd.f32 %v1167, %v1168
  %v1170 = vsel %vm1150, %v1133, 0.0
  %v1171 = vadd.f32 %v1169, %v1170
  %v1172 = vsel %vm1150, %v1136, 0.0
  %v1173 = vadd.f32 %v1171, %v1172
  %v1174 = vsel %vm1150, %v1139, 0.0
  %v1175 = vadd.f32 %v1173, %v1174
  %v1176 = vsel %vm1150, %v1142, 0.0
  %v1177 = vadd.f32 %v1175, %v1176
  %v1178 = vsel %vm1150, %v1145, 0.0
  %v1179 = vadd.f32 %v1177, %v1178
  %v1180 = vsel %vm1150, %v1148, 0.0
  %v1181 = vadd.f32 %v1179, %v1180
  %v1182 = vrot.slane %v1181, 4
  %v1183 = vadd.f32 %v1181, %v1182
  %v1184 = vrot.slane %v1183, 2
  %v1185 = vadd.f32 %v1183, %v1184
  %v1186 = vrot.slane %v1185, 1
  %v1187 = vadd.f32 %v1185, %v1186
  %v1188 = vrcp.pop 128.0
  %v1189 = vmul.f32 128.0, %v1188
  %v1190 = vsub.f32 1.0, %v1189
  %v1191 = vmul.f32 %v1188, %v1190
  %v1192 = vadd.f32 %v1188, %v1191
  %vm1193 = vweird.f32 %v1188
  %v1194 = vsel %vm1193, %v1188, %v1192
  %v1195 = vmul.f32 %v1187, %v1194
  %v1196 = vsub.f32 %v1103, %v1195
  %v1197 = vsub.f32 %v1106, %v1195
  %v1198 = vsub.f32 %v1109, %v1195
  %v1199 = vsub.f32 %v1112, %v1195
  %v1200 = vsub.f32 %v1115, %v1195
  %v1201 = vsub.f32 %v1118, %v1195
  %v1202 = vsub.f32 %v1121, %v1195
  %v1203 = vsub.f32 %v1124, %v1195
  %v1204 = vsub.f32 %v1127, %v1195
  %v1205 = vsub.f32 %v1130, %v1195
  %v1206 = vsub.f32 %v1133, %v1195
  %v1207 = vsub.f32 %v1136, %v1195
  %v1208 = vsub.f32 %v1139, %v1195
  %v1209 = vsub.f32 %v1142, %v1195
  %v1210 = vsub.f32 %v1145, %v1195
  %v1211 = vsub.f32 %v1148, %v1195
  %v1212 = vmul.f32 %v1196, %v1196
  %v1213 = vmul.f32 %v1197, %v1197
  %v1214 = vmul.f32 %v1198, %v1198
  %v1215 = vmul.f32 %v1199, %v1199
  %v1216 = vmul.f32 %v1200, %v1200
  %v1217 = vmul.f32 %v1201, %v1201
  %v1218 = vmul.f32 %v1202, %v1202
  %v1219 = vmul.f32 %v1203, %v1203
  %v1220 = vmul.f32 %v1204, %v1204
  %v1221 = vmul.f32 %v1205, %v1205
  %v1222 = vmul.f32 %v1206, %v1206
  %v1223 = vmul.f32 %v1207, %v1207
  %v1224 = vmul.f32 %v1208, %v1208
  %v1225 = vmul.f32 %v1209, %v1209
  %v1226 = vmul.f32 %v1210, %v1210
  %v1227 = vmul.f32 %v1211, %v1211
  %v1228 = vsel %vm1150, %v1212, 0.0
  %v1229 = vsel %vm1150, %v1213, 0.0
  %v1230 = vadd.f32 %v1228, %v1229
  %v1231 = vsel %vm1150, %v1214, 0.0
  %v1232 = vadd.f32 %v1230, %v1231
  %v1233 = vsel %vm1150, %v1215, 0.0
  %v1234 = vadd.f32 %v1232, %v1233
  %v1235 = vsel %vm1150, %v1216, 0.0
  %v1236 = vadd.f32 %v1234, %v1235
  %v1237 = vsel %vm1150, %v1217, 0.0
  %v1238 = vadd.f32 %v1236, %v1237
  %v1239 = vsel %vm1150, %v1218, 0.0
  %v1240 = vadd.f32 %v1238, %v1239
  %v1241 = vsel %vm1150, %v1219, 0.0
  %v1242 = vadd.f32 %v1240, %v1241
  %v1243 = vsel %vm1150, %v1220, 0.0
  %v1244 = vadd.f32 %v1242, %v1243
  %v1245 = vsel %vm1150, %v1221, 0.0
  %v1246 = vadd.f32 %v1244, %v1245
  %v1247 = vsel %vm1150, %v1222, 0.0
  %v1248 = vadd.f32 %v1246, %v1247
  %v1249 = vsel %vm1150, %v1223, 0.0
  %v1250 = vadd.f32 %v1248, %v1249
  %v1251 = vsel %vm1150, %v1224, 0.0
  %v1252 = vadd.f32 %v1250, %v1251
  %v1253 = vsel %vm1150, %v1225, 0.0
  %v1254 = vadd.f32 %v1252, %v1253
  %v1255 = vsel %vm1150, %v1226, 0.0
  %v1256 = vadd.f32 %v1254, %v1255
  %v1257 = vsel %vm1150, %v1227, 0.0
  %v1258 = vadd.f32 %v1256, %v1257
  %v1259 = vrot.slane %v1258, 4
  %v1260 = vadd.f32 %v1258, %v1259
  %v1261 = vrot.slane %v1260, 2
  %v1262 = vadd.f32 %v1260, %v1261
  %v1263 = vrot.slane %v1262, 1
  %v1264 = vadd.f32 %v1262, %v1263
  %v1265 = vmul.f32 %v1264, %v1194
  %v1266 = vld [vmem:[%s2] sm:$0x1]
  %v1267 = vadd.f32 %v1265, 1e-05
  %v1268 = vrsqrt.pop %v1267
  %v1269 = vmul.f32 %v1268, %v1267
  %v1270 = vmul.f32 %v1269, %v1268
  %v1271 = vmul.f32 0.5, %v1270
  %v1272 = vsub.f32 1.5, %v1271
  %v1273 = vmul.f32 %v1268, %v1272
  %vm1274 = vweird.f32 %v1267
  %vm1275 = vweird.f32 %v1268
  %vm1276 = vmor %vm1274, %vm1275
  %v1277 = vsel %vm1276, %v1268, %v1273
  %v1278 = vmul.f32 %v1266, %v1277
  %v1280 = vperm.slane %v1278, 0
  %v1282 = vmul.f32 %v1196, %v1280
  %v1283 = vmul.f32 %v1197, %v1280
  %v1284 = vmul.f32 %v1198, %v1280
  %v1285 = vmul.f32 %v1199, %v1280
  %v1286 = vmul.f32 %v1200, %v1280
  %v1287 = vmul.f32 %v1201, %v1280
  %v1288 = vmul.f32 %v1202, %v1280
  %v1289 = vmul.f32 %v1203, %v1280
  %v1290 = vmul.f32 %v1204, %v1280
  %v1291 = vmul.f32 %v1205, %v1280
  %v1292 = vmul.f32 %v1206, %v1280
  %v1293 = vmul.f32 %v1207, %v1280
  %v1294 = vmul.f32 %v1208, %v1280
  %v1295 = vmul.f32 %v1209, %v1280
  %v1296 = vmul.f32 %v1210, %v1280
  %v1297 = vmul.f32 %v1211, %v1280
  %v1298 = vld [vmem:[%s3] sm:$0x1]
  %v1300 = vperm.slane %v1298, 0
  %v1302 = vadd.f32 %v1282, %v1300
  %v1303 = vadd.f32 %v1283, %v1300
  %v1304 = vadd.f32 %v1284, %v1300
  %v1305 = vadd.f32 %v1285, %v1300
  %v1306 = vadd.f32 %v1286, %v1300
  %v1307 = vadd.f32 %v1287, %v1300
  %v1308 = vadd.f32 %v1288, %v1300
  %v1309 = vadd.f32 %v1289, %v1300
  %v1310 = vadd.f32 %v1290, %v1300
  %v1311 = vadd.f32 %v1291, %v1300
  %v1312 = vadd.f32 %v1292, %v1300
  %v1313 = vadd.f32 %v1293, %v1300
  %v1314 = vadd.f32 %v1294, %v1300
  %v1315 = vadd.f32 %v1295, %v1300
  %v1316 = vadd.f32 %v1296, %v1300
  %v1317 = vadd.f32 %v1297, %v1300
  %v1318 = vmax.f32 %v1302, 0.0
  %v1319 = vmax.f32 %v1303, 0.0
  %v1320 = vmax.f32 %v1304, 0.0
  %v1321 = vmax.f32 %v1305, 0.0
  %v1322 = vmax.f32 %v1306, 0.0
  %v1323 = vmax.f32 %v1307, 0.0
  %v1324 = vmax.f32 %v1308, 0.0
  %v1325 = vmax.f32 %v1309, 0.0
  %v1326 = vmax.f32 %v1310, 0.0
  %v1327 = vmax.f32 %v1311, 0.0
  %v1328 = vmax.f32 %v1312, 0.0
  %v1329 = vmax.f32 %v1313, 0.0
  %v1330 = vmax.f32 %v1314, 0.0
  %v1331 = vmax.f32 %v1315, 0.0
  %v1332 = vmax.f32 %v1316, 0.0
  %v1333 = vmax.f32 %v1317, 0.0
  %1334 = vst.msk [vmem:[#allocation3] sm:$0xff] %vm1150, 0.0
  %vm1335 = vcmask 123904
  %1336 = vst.msk [vmem:[#allocation3 + $0x8] sm:$0x3] %vm1335, 0.0
  %1337 = vst.msk [vmem:[#allocation3 + $0xa0] sm:$0xff] %vm1150, 0.0
  %1338 = vst.msk [vmem:[#allocation3 + $0xa8] sm:$0x3] %vm1335, 0.0
  %s1339 = scalar_lea.vmem [#allocation3], 144
  %1340 = vst.msk [vmem:[%s1339] sm:$0xff] %vm1150, 0.0
  %1341 = vst.msk [vmem:[%s1339 + $0x8] sm:$0x3] %vm1335, 0.0
  %1342 = vst.msk [vmem:[%s1339 + $0xa0] sm:$0xff] %vm1150, 0.0
  %1343 = vst.msk [vmem:[%s1339 + $0xa8] sm:$0x3] %vm1335, 0.0
  %s1344 = scalar_lea.vmem [#allocation3], 16
  %vm1345 = vcmask 122880
  %1346 = vst.msk [vmem:[%s1344] sm:$0x1] %vm1345, 0.0
  %1347 = vst.msk [vmem:[%s1344 + $0x10] sm:$0x1] %vm1345, 0.0
  %1348 = vst.msk [vmem:[%s1344 + $0x20] sm:$0x1] %vm1345, 0.0
  %1349 = vst.msk [vmem:[%s1344 + $0x30] sm:$0x1] %vm1345, 0.0
  %1350 = vst.msk [vmem:[%s1344 + $0x40] sm:$0x1] %vm1345, 0.0
  %1351 = vst.msk [vmem:[%s1344 + $0x50] sm:$0x1] %vm1345, 0.0
  %1352 = vst.msk [vmem:[%s1344 + $0x60] sm:$0x1] %vm1345, 0.0
  %1353 = vst.msk [vmem:[%s1344 + $0x70] sm:$0x1] %vm1345, 0.0
  %1354 = vst.msk [vmem:[%s1344 + $0xa0] sm:$0x1] %vm1345, 0.0
  %1355 = vst.msk [vmem:[%s1344 + $0xb0] sm:$0x1] %vm1345, 0.0
  %1356 = vst.msk [vmem:[%s1344 + $0xc0] sm:$0x1] %vm1345, 0.0
  %1357 = vst.msk [vmem:[%s1344 + $0xd0] sm:$0x1] %vm1345, 0.0
  %1358 = vst.msk [vmem:[%s1344 + $0xe0] sm:$0x1] %vm1345, 0.0
  %1359 = vst.msk [vmem:[%s1344 + $0xf0] sm:$0x1] %vm1345, 0.0
  %1360 = vst.msk [vmem:[%s1344 + $0x100] sm:$0x1] %vm1345, 0.0
  %1361 = vst.msk [vmem:[%s1344 + $0x110] sm:$0x1] %vm1345, 0.0
  %1362 = vst.msk [vmem:[%s1344 + $0x9] sm:$0x1] %vm1345, 0.0
  %1363 = vst.msk [vmem:[%s1344 + $0x19] sm:$0x1] %vm1345, 0.0
  %1364 = vst.msk [vmem:[%s1344 + $0x29] sm:$0x1] %vm1345, 0.0
  %1365 = vst.msk [vmem:[%s1344 + $0x39] sm:$0x1] %vm1345, 0.0
  %1366 = vst.msk [vmem:[%s1344 + $0x49] sm:$0x1] %vm1345, 0.0
  %1367 = vst.msk [vmem:[%s1344 + $0x59] sm:$0x1] %vm1345, 0.0
  %1368 = vst.msk [vmem:[%s1344 + $0x69] sm:$0x1] %vm1345, 0.0
  %1369 = vst.msk [vmem:[%s1344 + $0x79] sm:$0x1] %vm1345, 0.0
  %1370 = vst.msk [vmem:[%s1344 + $0xa9] sm:$0x1] %vm1345, 0.0
  %1371 = vst.msk [vmem:[%s1344 + $0xb9] sm:$0x1] %vm1345, 0.0
  %1372 = vst.msk [vmem:[%s1344 + $0xc9] sm:$0x1] %vm1345, 0.0
  %1373 = vst.msk [vmem:[%s1344 + $0xd9] sm:$0x1] %vm1345, 0.0
  %1374 = vst.msk [vmem:[%s1344 + $0xe9] sm:$0x1] %vm1345, 0.0
  %1375 = vst.msk [vmem:[%s1344 + $0xf9] sm:$0x1] %vm1345, 0.0
  %1376 = vst.msk [vmem:[%s1344 + $0x109] sm:$0x1] %vm1345, 0.0
  %1377 = vst.msk [vmem:[%s1344 + $0x119] sm:$0x1] %vm1345, 0.0
  %1378 = vst.msk [vmem:[%s1344 + $0x1] sm:$0xff] %vm1150, %v1318
  %1379 = vst.msk [vmem:[%s1344 + $0x11] sm:$0xff] %vm1150, %v1319
  %1380 = vst.msk [vmem:[%s1344 + $0x21] sm:$0xff] %vm1150, %v1320
  %1381 = vst.msk [vmem:[%s1344 + $0x31] sm:$0xff] %vm1150, %v1321
  %1382 = vst.msk [vmem:[%s1344 + $0x41] sm:$0xff] %vm1150, %v1322
  %1383 = vst.msk [vmem:[%s1344 + $0x51] sm:$0xff] %vm1150, %v1323
  %1384 = vst.msk [vmem:[%s1344 + $0x61] sm:$0xff] %vm1150, %v1324
  %1385 = vst.msk [vmem:[%s1344 + $0x71] sm:$0xff] %vm1150, %v1325
  %1386 = vst.msk [vmem:[%s1344 + $0xa1] sm:$0xff] %vm1150, %v1326
  %1387 = vst.msk [vmem:[%s1344 + $0xb1] sm:$0xff] %vm1150, %v1327
  %1388 = vst.msk [vmem:[%s1344 + $0xc1] sm:$0xff] %vm1150, %v1328
  %1389 = vst.msk [vmem:[%s1344 + $0xd1] sm:$0xff] %vm1150, %v1329
  %1390 = vst.msk [vmem:[%s1344 + $0xe1] sm:$0xff] %vm1150, %v1330
  %1391 = vst.msk [vmem:[%s1344 + $0xf1] sm:$0xff] %vm1150, %v1331
  %1392 = vst.msk [vmem:[%s1344 + $0x101] sm:$0xff] %vm1150, %v1332
  %1393 = vst.msk [vmem:[%s1344 + $0x111] sm:$0xff] %vm1150, %v1333
  %v1394 = vld [vmem:[#allocation3] sm:$0xff]
  %v1395 = vld [vmem:[#allocation3 + $0x10] sm:$0xff]
  %v1396 = vld [vmem:[#allocation3 + $0x20] sm:$0xff]
  %v1397 = vld [vmem:[#allocation3 + $0x30] sm:$0xff]
  %v1398 = vld [vmem:[#allocation3 + $0x40] sm:$0xff]
  %v1399 = vld [vmem:[#allocation3 + $0x50] sm:$0xff]
  %v1400 = vld [vmem:[#allocation3 + $0x60] sm:$0xff]
  %v1401 = vld [vmem:[#allocation3 + $0x70] sm:$0xff]
  %v1402 = vld [vmem:[#allocation3 + $0xa0] sm:$0xff]
  %v1403 = vld [vmem:[#allocation3 + $0xb0] sm:$0xff]
  %v1404 = vld [vmem:[#allocation3 + $0xc0] sm:$0xff]
  %v1405 = vld [vmem:[#allocation3 + $0xd0] sm:$0xff]
  %v1406 = vld [vmem:[#allocation3 + $0xe0] sm:$0xff]
  %v1407 = vld [vmem:[#allocation3 + $0xf0] sm:$0xff]
  %v1408 = vld [vmem:[#allocation3 + $0x100] sm:$0xff]
  %v1409 = vld [vmem:[#allocation3 + $0x110] sm:$0xff]
  %1410 = vst.msk [vmem:[#allocation5] sm:$0xff] %vm1150, %v1394
  %1411 = vst.msk [vmem:[#allocation5 + $0x10] sm:$0xff] %vm1150, %v1395
  %1412 = vst.msk [vmem:[#allocation5 + $0x20] sm:$0xff] %vm1150, %v1396
  %1413 = vst.msk [vmem:[#allocation5 + $0x30] sm:$0xff] %vm1150, %v1397
  %1414 = vst.msk [vmem:[#allocation5 + $0x40] sm:$0xff] %vm1150, %v1398
  %1415 = vst.msk [vmem:[#allocation5 + $0x50] sm:$0xff] %vm1150, %v1399
  %1416 = vst.msk [vmem:[#allocation5 + $0x60] sm:$0xff] %vm1150, %v1400
  %1417 = vst.msk [vmem:[#allocation5 + $0x70] sm:$0xff] %vm1150, %v1401
  %1418 = vst.msk [vmem:[#allocation5 + $0x80] sm:$0xff] %vm1150, %v1402
  %1419 = vst.msk [vmem:[#allocation5 + $0x90] sm:$0xff] %vm1150, %v1403
  %1420 = vst.msk [vmem:[#allocation5 + $0xa0] sm:$0xff] %vm1150, %v1404
  %1421 = vst.msk [vmem:[#allocation5 + $0xb0] sm:$0xff] %vm1150, %v1405
  %1422 = vst.msk [vmem:[#allocation5 + $0xc0] sm:$0xff] %vm1150, %v1406
  %1423 = vst.msk [vmem:[#allocation5 + $0xd0] sm:$0xff] %vm1150, %v1407
  %1424 = vst.msk [vmem:[#allocation5 + $0xe0] sm:$0xff] %vm1150, %v1408
  %1425 = vst.msk [vmem:[#allocation5 + $0xf0] sm:$0xff] %vm1150, %v1409
  %v1426 = vld [vmem:[#allocation3 + $0x1] sm:$0xff]
  %v1427 = vld [vmem:[#allocation3 + $0x11] sm:$0xff]
  %v1428 = vld [vmem:[#allocation3 + $0x21] sm:$0xff]
  %v1429 = vld [vmem:[#allocation3 + $0x31] sm:$0xff]
  %v1430 = vld [vmem:[#allocation3 + $0x41] sm:$0xff]
  %v1431 = vld [vmem:[#allocation3 + $0x51] sm:$0xff]
  %v1432 = vld [vmem:[#allocation3 + $0x61] sm:$0xff]
  %v1433 = vld [vmem:[#allocation3 + $0x71] sm:$0xff]
  %v1434 = vld [vmem:[#allocation3 + $0xa1] sm:$0xff]
  %v1435 = vld [vmem:[#allocation3 + $0xb1] sm:$0xff]
  %v1436 = vld [vmem:[#allocation3 + $0xc1] sm:$0xff]
  %v1437 = vld [vmem:[#allocation3 + $0xd1] sm:$0xff]
  %v1438 = vld [vmem:[#allocation3 + $0xe1] sm:$0xff]
  %v1439 = vld [vmem:[#allocation3 + $0xf1] sm:$0xff]
  %v1440 = vld [vmem:[#allocation3 + $0x101] sm:$0xff]
  %v1441 = vld [vmem:[#allocation3 + $0x111] sm:$0xff]
  %1458 = vrot.lane.b32.xlu0 %v1426, 16
  %v1459 = vpop.permute.xlu0 %1458
  %1460 = vrot.lane.b32.xlu0 %v1427, 16
  %v1461 = vpop.permute.xlu0 %1460
  %1462 = vrot.lane.b32.xlu0 %v1428, 16
  %v1463 = vpop.permute.xlu0 %1462
  %1464 = vrot.lane.b32.xlu0 %v1429, 16
  %v1465 = vpop.permute.xlu0 %1464
  %1466 = vrot.lane.b32.xlu0 %v1430, 16
  %v1467 = vpop.permute.xlu0 %1466
  %1468 = vrot.lane.b32.xlu0 %v1431, 16
  %v1469 = vpop.permute.xlu0 %1468
  %1470 = vrot.lane.b32.xlu0 %v1432, 16
  %v1471 = vpop.permute.xlu0 %1470
  %1472 = vrot.lane.b32.xlu0 %v1433, 16
  %v1473 = vpop.permute.xlu0 %1472
  %1474 = vrot.lane.b32.xlu0 %v1434, 16
  %v1475 = vpop.permute.xlu0 %1474
  %1476 = vrot.lane.b32.xlu0 %v1435, 16
  %v1477 = vpop.permute.xlu0 %1476
  %1478 = vrot.lane.b32.xlu0 %v1436, 16
  %v1479 = vpop.permute.xlu0 %1478
  %1480 = vrot.lane.b32.xlu0 %v1437, 16
  %v1481 = vpop.permute.xlu0 %1480
  %1482 = vrot.lane.b32.xlu0 %v1438, 16
  %v1483 = vpop.permute.xlu0 %1482
  %1484 = vrot.lane.b32.xlu0 %v1439, 16
  %v1485 = vpop.permute.xlu0 %1484
  %1486 = vrot.lane.b32.xlu0 %v1440, 16
  %v1487 = vpop.permute.xlu0 %1486
  %1488 = vrot.lane.b32.xlu0 %v1441, 16
  %v1489 = vpop.permute.xlu0 %1488
  %vm1506 = vcmask 261248
  %1507 = vst.msk [vmem:[#allocation5] sm:$0xff] %vm1506, %v1459
  %1508 = vst.msk [vmem:[#allocation5 + $0x10] sm:$0xff] %vm1506, %v1461
  %1509 = vst.msk [vmem:[#allocation5 + $0x20] sm:$0xff] %vm1506, %v1463
  %1510 = vst.msk [vmem:[#allocation5 + $0x30] sm:$0xff] %vm1506, %v1465
  %1511 = vst.msk [vmem:[#allocation5 + $0x40] sm:$0xff] %vm1506, %v1467
  %1512 = vst.msk [vmem:[#allocation5 + $0x50] sm:$0xff] %vm1506, %v1469
  %1513 = vst.msk [vmem:[#allocation5 + $0x60] sm:$0xff] %vm1506, %v1471
  %1514 = vst.msk [vmem:[#allocation5 + $0x70] sm:$0xff] %vm1506, %v1473
  %1515 = vst.msk [vmem:[#allocation5 + $0x80] sm:$0xff] %vm1506, %v1475
  %1516 = vst.msk [vmem:[#allocation5 + $0x90] sm:$0xff] %vm1506, %v1477
  %1517 = vst.msk [vmem:[#allocation5 + $0xa0] sm:$0xff] %vm1506, %v1479
  %1518 = vst.msk [vmem:[#allocation5 + $0xb0] sm:$0xff] %vm1506, %v1481
  %1519 = vst.msk [vmem:[#allocation5 + $0xc0] sm:$0xff] %vm1506, %v1483
  %1520 = vst.msk [vmem:[#allocation5 + $0xd0] sm:$0xff] %vm1506, %v1485
  %1521 = vst.msk [vmem:[#allocation5 + $0xe0] sm:$0xff] %vm1506, %v1487
  %1522 = vst.msk [vmem:[#allocation5 + $0xf0] sm:$0xff] %vm1506, %v1489
  %v1523 = vld [vmem:[#allocation3 + $0x2] sm:$0xff]
  %v1524 = vld [vmem:[#allocation3 + $0x12] sm:$0xff]
  %v1525 = vld [vmem:[#allocation3 + $0x22] sm:$0xff]
  %v1526 = vld [vmem:[#allocation3 + $0x32] sm:$0xff]
  %v1527 = vld [vmem:[#allocation3 + $0x42] sm:$0xff]
  %v1528 = vld [vmem:[#allocation3 + $0x52] sm:$0xff]
  %v1529 = vld [vmem:[#allocation3 + $0x62] sm:$0xff]
  %v1530 = vld [vmem:[#allocation3 + $0x72] sm:$0xff]
  %v1531 = vld [vmem:[#allocation3 + $0xa2] sm:$0xff]
  %v1532 = vld [vmem:[#allocation3 + $0xb2] sm:$0xff]
  %v1533 = vld [vmem:[#allocation3 + $0xc2] sm:$0xff]
  %v1534 = vld [vmem:[#allocation3 + $0xd2] sm:$0xff]
  %v1535 = vld [vmem:[#allocation3 + $0xe2] sm:$0xff]
  %v1536 = vld [vmem:[#allocation3 + $0xf2] sm:$0xff]
  %v1537 = vld [vmem:[#allocation3 + $0x102] sm:$0xff]
  %v1538 = vld [vmem:[#allocation3 + $0x112] sm:$0xff]
  %1555 = vrot.lane.b32.xlu0 %v1523, 32
  %v1556 = vpop.permute.xlu0 %1555
  %1557 = vrot.lane.b32.xlu0 %v1524, 32
  %v1558 = vpop.permute.xlu0 %1557
  %1559 = vrot.lane.b32.xlu0 %v1525, 32
  %v1560 = vpop.permute.xlu0 %1559
  %1561 = vrot.lane.b32.xlu0 %v1526, 32
  %v1562 = vpop.permute.xlu0 %1561
  %1563 = vrot.lane.b32.xlu0 %v1527, 32
  %v1564 = vpop.permute.xlu0 %1563
  %1565 = vrot.lane.b32.xlu0 %v1528, 32
  %v1566 = vpop.permute.xlu0 %1565
  %1567 = vrot.lane.b32.xlu0 %v1529, 32
  %v1568 = vpop.permute.xlu0 %1567
  %1569 = vrot.lane.b32.xlu0 %v1530, 32
  %v1570 = vpop.permute.xlu0 %1569
  %1571 = vrot.lane.b32.xlu0 %v1531, 32
  %v1572 = vpop.permute.xlu0 %1571
  %1573 = vrot.lane.b32.xlu0 %v1532, 32
  %v1574 = vpop.permute.xlu0 %1573
  %1575 = vrot.lane.b32.xlu0 %v1533, 32
  %v1576 = vpop.permute.xlu0 %1575
  %1577 = vrot.lane.b32.xlu0 %v1534, 32
  %v1578 = vpop.permute.xlu0 %1577
  %1579 = vrot.lane.b32.xlu0 %v1535, 32
  %v1580 = vpop.permute.xlu0 %1579
  %1581 = vrot.lane.b32.xlu0 %v1536, 32
  %v1582 = vpop.permute.xlu0 %1581
  %1583 = vrot.lane.b32.xlu0 %v1537, 32
  %v1584 = vpop.permute.xlu0 %1583
  %1585 = vrot.lane.b32.xlu0 %v1538, 32
  %v1586 = vpop.permute.xlu0 %1585
  %vm1603 = vcmask 392448
  %1604 = vst.msk [vmem:[#allocation5] sm:$0xff] %vm1603, %v1556
  %1605 = vst.msk [vmem:[#allocation5 + $0x10] sm:$0xff] %vm1603, %v1558
  %1606 = vst.msk [vmem:[#allocation5 + $0x20] sm:$0xff] %vm1603, %v1560
  %1607 = vst.msk [vmem:[#allocation5 + $0x30] sm:$0xff] %vm1603, %v1562
  %1608 = vst.msk [vmem:[#allocation5 + $0x40] sm:$0xff] %vm1603, %v1564
  %1609 = vst.msk [vmem:[#allocation5 + $0x50] sm:$0xff] %vm1603, %v1566
  %1610 = vst.msk [vmem:[#allocation5 + $0x60] sm:$0xff] %vm1603, %v1568
  %1611 = vst.msk [vmem:[#allocation5 + $0x70] sm:$0xff] %vm1603, %v1570
  %1612 = vst.msk [vmem:[#allocation5 + $0x80] sm:$0xff] %vm1603, %v1572
  %1613 = vst.msk [vmem:[#allocation5 + $0x90] sm:$0xff] %vm1603, %v1574
  %1614 = vst.msk [vmem:[#allocation5 + $0xa0] sm:$0xff] %vm1603, %v1576
  %1615 = vst.msk [vmem:[#allocation5 + $0xb0] sm:$0xff] %vm1603, %v1578
  %1616 = vst.msk [vmem:[#allocation5 + $0xc0] sm:$0xff] %vm1603, %v1580
  %1617 = vst.msk [vmem:[#allocation5 + $0xd0] sm:$0xff] %vm1603, %v1582
  %1618 = vst.msk [vmem:[#allocation5 + $0xe0] sm:$0xff] %vm1603, %v1584
  %1619 = vst.msk [vmem:[#allocation5 + $0xf0] sm:$0xff] %vm1603, %v1586
  %v1620 = vld [vmem:[%s1344] sm:$0xff]
  %v1621 = vld [vmem:[%s1344 + $0x10] sm:$0xff]
  %v1622 = vld [vmem:[%s1344 + $0x20] sm:$0xff]
  %v1623 = vld [vmem:[%s1344 + $0x30] sm:$0xff]
  %v1624 = vld [vmem:[%s1344 + $0x40] sm:$0xff]
  %v1625 = vld [vmem:[%s1344 + $0x50] sm:$0xff]
  %v1626 = vld [vmem:[%s1344 + $0x60] sm:$0xff]
  %v1627 = vld [vmem:[%s1344 + $0x70] sm:$0xff]
  %v1628 = vld [vmem:[%s1344 + $0xa0] sm:$0xff]
  %v1629 = vld [vmem:[%s1344 + $0xb0] sm:$0xff]
  %v1630 = vld [vmem:[%s1344 + $0xc0] sm:$0xff]
  %v1631 = vld [vmem:[%s1344 + $0xd0] sm:$0xff]
  %v1632 = vld [vmem:[%s1344 + $0xe0] sm:$0xff]
  %v1633 = vld [vmem:[%s1344 + $0xf0] sm:$0xff]
  %v1634 = vld [vmem:[%s1344 + $0x100] sm:$0xff]
  %v1635 = vld [vmem:[%s1344 + $0x110] sm:$0xff]
  %1652 = vrot.lane.b32.xlu0 %v1620, 48
  %v1653 = vpop.permute.xlu0 %1652
  %1654 = vrot.lane.b32.xlu0 %v1621, 48
  %v1655 = vpop.permute.xlu0 %1654
  %1656 = vrot.lane.b32.xlu0 %v1622, 48
  %v1657 = vpop.permute.xlu0 %1656
  %1658 = vrot.lane.b32.xlu0 %v1623, 48
  %v1659 = vpop.permute.xlu0 %1658
  %1660 = vrot.lane.b32.xlu0 %v1624, 48
  %v1661 = vpop.permute.xlu0 %1660
  %1662 = vrot.lane.b32.xlu0 %v1625, 48
  %v1663 = vpop.permute.xlu0 %1662
  %1664 = vrot.lane.b32.xlu0 %v1626, 48
  %v1665 = vpop.permute.xlu0 %1664
  %1666 = vrot.lane.b32.xlu0 %v1627, 48
  %v1667 = vpop.permute.xlu0 %1666
  %1668 = vrot.lane.b32.xlu0 %v1628, 48
  %v1669 = vpop.permute.xlu0 %1668
  %1670 = vrot.lane.b32.xlu0 %v1629, 48
  %v1671 = vpop.permute.xlu0 %1670
  %1672 = vrot.lane.b32.xlu0 %v1630, 48
  %v1673 = vpop.permute.xlu0 %1672
  %1674 = vrot.lane.b32.xlu0 %v1631, 48
  %v1675 = vpop.permute.xlu0 %1674
  %1676 = vrot.lane.b32.xlu0 %v1632, 48
  %v1677 = vpop.permute.xlu0 %1676
  %1678 = vrot.lane.b32.xlu0 %v1633, 48
  %v1679 = vpop.permute.xlu0 %1678
  %1680 = vrot.lane.b32.xlu0 %v1634, 48
  %v1681 = vpop.permute.xlu0 %1680
  %1682 = vrot.lane.b32.xlu0 %v1635, 48
  %v1683 = vpop.permute.xlu0 %1682
  %vm1700 = vcmask 523648
  %1701 = vst.msk [vmem:[#allocation5] sm:$0xff] %vm1700, %v1653
  %1702 = vst.msk [vmem:[#allocation5 + $0x10] sm:$0xff] %vm1700, %v1655
  %1703 = vst.msk [vmem:[#allocation5 + $0x20] sm:$0xff] %vm1700, %v1657
  %1704 = vst.msk [vmem:[#allocation5 + $0x30] sm:$0xff] %vm1700, %v1659
  %1705 = vst.msk [vmem:[#allocation5 + $0x40] sm:$0xff] %vm1700, %v1661
  %1706 = vst.msk [vmem:[#allocation5 + $0x50] sm:$0xff] %vm1700, %v1663
  %1707 = vst.msk [vmem:[#allocation5 + $0x60] sm:$0xff] %vm1700, %v1665
  %1708 = vst.msk [vmem:[#allocation5 + $0x70] sm:$0xff] %vm1700, %v1667
  %1709 = vst.msk [vmem:[#allocation5 + $0x80] sm:$0xff] %vm1700, %v1669
  %1710 = vst.msk [vmem:[#allocation5 + $0x90] sm:$0xff] %vm1700, %v1671
  %1711 = vst.msk [vmem:[#allocation5 + $0xa0] sm:$0xff] %vm1700, %v1673
  %1712 = vst.msk [vmem:[#allocation5 + $0xb0] sm:$0xff] %vm1700, %v1675
  %1713 = vst.msk [vmem:[#allocation5 + $0xc0] sm:$0xff] %vm1700, %v1677
  %1714 = vst.msk [vmem:[#allocation5 + $0xd0] sm:$0xff] %vm1700, %v1679
  %1715 = vst.msk [vmem:[#allocation5 + $0xe0] sm:$0xff] %vm1700, %v1681
  %1716 = vst.msk [vmem:[#allocation5 + $0xf0] sm:$0xff] %vm1700, %v1683
  %v1717 = vld [vmem:[%s1344 + $0x1] sm:$0xff]
  %v1718 = vld [vmem:[%s1344 + $0x11] sm:$0xff]
  %v1719 = vld [vmem:[%s1344 + $0x21] sm:$0xff]
  %v1720 = vld [vmem:[%s1344 + $0x31] sm:$0xff]
  %v1721 = vld [vmem:[%s1344 + $0x41] sm:$0xff]
  %v1722 = vld [vmem:[%s1344 + $0x51] sm:$0xff]
  %v1723 = vld [vmem:[%s1344 + $0x61] sm:$0xff]
  %v1724 = vld [vmem:[%s1344 + $0x71] sm:$0xff]
  %v1725 = vld [vmem:[%s1344 + $0xa1] sm:$0xff]
  %v1726 = vld [vmem:[%s1344 + $0xb1] sm:$0xff]
  %v1727 = vld [vmem:[%s1344 + $0xc1] sm:$0xff]
  %v1728 = vld [vmem:[%s1344 + $0xd1] sm:$0xff]
  %v1729 = vld [vmem:[%s1344 + $0xe1] sm:$0xff]
  %v1730 = vld [vmem:[%s1344 + $0xf1] sm:$0xff]
  %v1731 = vld [vmem:[%s1344 + $0x101] sm:$0xff]
  %v1732 = vld [vmem:[%s1344 + $0x111] sm:$0xff]
  %1749 = vrot.lane.b32.xlu0 %v1717, 64
  %v1750 = vpop.permute.xlu0 %1749
  %1751 = vrot.lane.b32.xlu0 %v1718, 64
  %v1752 = vpop.permute.xlu0 %1751
  %1753 = vrot.lane.b32.xlu0 %v1719, 64
  %v1754 = vpop.permute.xlu0 %1753
  %1755 = vrot.lane.b32.xlu0 %v1720, 64
  %v1756 = vpop.permute.xlu0 %1755
  %1757 = vrot.lane.b32.xlu0 %v1721, 64
  %v1758 = vpop.permute.xlu0 %1757
  %1759 = vrot.lane.b32.xlu0 %v1722, 64
  %v1760 = vpop.permute.xlu0 %1759
  %1761 = vrot.lane.b32.xlu0 %v1723, 64
  %v1762 = vpop.permute.xlu0 %1761
  %1763 = vrot.lane.b32.xlu0 %v1724, 64
  %v1764 = vpop.permute.xlu0 %1763
  %1765 = vrot.lane.b32.xlu0 %v1725, 64
  %v1766 = vpop.permute.xlu0 %1765
  %1767 = vrot.lane.b32.xlu0 %v1726, 64
  %v1768 = vpop.permute.xlu0 %1767
  %1769 = vrot.lane.b32.xlu0 %v1727, 64
  %v1770 = vpop.permute.xlu0 %1769
  %1771 = vrot.lane.b32.xlu0 %v1728, 64
  %v1772 = vpop.permute.xlu0 %1771
  %1773 = vrot.lane.b32.xlu0 %v1729, 64
  %v1774 = vpop.permute.xlu0 %1773
  %1775 = vrot.lane.b32.xlu0 %v1730, 64
  %v1776 = vpop.permute.xlu0 %1775
  %1777 = vrot.lane.b32.xlu0 %v1731, 64
  %v1778 = vpop.permute.xlu0 %1777
  %1779 = vrot.lane.b32.xlu0 %v1732, 64
  %v1780 = vpop.permute.xlu0 %1779
  %vm1797 = vcmask 654848
  %1798 = vst.msk [vmem:[#allocation5] sm:$0xff] %vm1797, %v1750
  %1799 = vst.msk [vmem:[#allocation5 + $0x10] sm:$0xff] %vm1797, %v1752
  %1800 = vst.msk [vmem:[#allocation5 + $0x20] sm:$0xff] %vm1797, %v1754
  %1801 = vst.msk [vmem:[#allocation5 + $0x30] sm:$0xff] %vm1797, %v1756
  %1802 = vst.msk [vmem:[#allocation5 + $0x40] sm:$0xff] %vm1797, %v1758
  %1803 = vst.msk [vmem:[#allocation5 + $0x50] sm:$0xff] %vm1797, %v1760
  %1804 = vst.msk [vmem:[#allocation5 + $0x60] sm:$0xff] %vm1797, %v1762
  %1805 = vst.msk [vmem:[#allocation5 + $0x70] sm:$0xff] %vm1797, %v1764
  %1806 = vst.msk [vmem:[#allocation5 + $0x80] sm:$0xff] %vm1797, %v1766
  %1807 = vst.msk [vmem:[#allocation5 + $0x90] sm:$0xff] %vm1797, %v1768
  %1808 = vst.msk [vmem:[#allocation5 + $0xa0] sm:$0xff] %vm1797, %v1770
  %1809 = vst.msk [vmem:[#allocation5 + $0xb0] sm:$0xff] %vm1797, %v1772
  %1810 = vst.msk [vmem:[#allocation5 + $0xc0] sm:$0xff] %vm1797, %v1774
  %1811 = vst.msk [vmem:[#allocation5 + $0xd0] sm:$0xff] %vm1797, %v1776
  %1812 = vst.msk [vmem:[#allocation5 + $0xe0] sm:$0xff] %vm1797, %v1778
  %1813 = vst.msk [vmem:[#allocation5 + $0xf0] sm:$0xff] %vm1797, %v1780
  %v1814 = vld [vmem:[%s1344 + $0x2] sm:$0xff]
  %v1815 = vld [vmem:[%s1344 + $0x12] sm:$0xff]
  %v1816 = vld [vmem:[%s1344 + $0x22] sm:$0xff]
  %v1817 = vld [vmem:[%s1344 + $0x32] sm:$0xff]
  %v1818 = vld [vmem:[%s1344 + $0x42] sm:$0xff]
  %v1819 = vld [vmem:[%s1344 + $0x52] sm:$0xff]
  %v1820 = vld [vmem:[%s1344 + $0x62] sm:$0xff]
  %v1821 = vld [vmem:[%s1344 + $0x72] sm:$0xff]
  %v1822 = vld [vmem:[%s1344 + $0xa2] sm:$0xff]
  %v1823 = vld [vmem:[%s1344 + $0xb2] sm:$0xff]
  %v1824 = vld [vmem:[%s1344 + $0xc2] sm:$0xff]
  %v1825 = vld [vmem:[%s1344 + $0xd2] sm:$0xff]
  %v1826 = vld [vmem:[%s1344 + $0xe2] sm:$0xff]
  %v1827 = vld [vmem:[%s1344 + $0xf2] sm:$0xff]
  %v1828 = vld [vmem:[%s1344 + $0x102] sm:$0xff]
  %v1829 = vld [vmem:[%s1344 + $0x112] sm:$0xff]
  %1846 = vrot.lane.b32.xlu0 %v1814, 80
  %v1847 = vpop.permute.xlu0 %1846
  %1848 = vrot.lane.b32.xlu0 %v1815, 80
  %v1849 = vpop.permute.xlu0 %1848
  %1850 = vrot.lane.b32.xlu0 %v1816, 80
  %v1851 = vpop.permute.xlu0 %1850
  %1852 = vrot.lane.b32.xlu0 %v1817, 80
  %v1853 = vpop.permute.xlu0 %1852
  %1854 = vrot.lane.b32.xlu0 %v1818, 80
  %v1855 = vpop.permute.xlu0 %1854
  %1856 = vrot.lane.b32.xlu0 %v1819, 80
  %v1857 = vpop.permute.xlu0 %1856
  %1858 = vrot.lane.b32.xlu0 %v1820, 80
  %v1859 = vpop.permute.xlu0 %1858
  %1860 = vrot.lane.b32.xlu0 %v1821, 80
  %v1861 = vpop.permute.xlu0 %1860
  %1862 = vrot.lane.b32.xlu0 %v1822, 80
  %v1863 = vpop.permute.xlu0 %1862
  %1864 = vrot.lane.b32.xlu0 %v1823, 80
  %v1865 = vpop.permute.xlu0 %1864
  %1866 = vrot.lane.b32.xlu0 %v1824, 80
  %v1867 = vpop.permute.xlu0 %1866
  %1868 = vrot.lane.b32.xlu0 %v1825, 80
  %v1869 = vpop.permute.xlu0 %1868
  %1870 = vrot.lane.b32.xlu0 %v1826, 80
  %v1871 = vpop.permute.xlu0 %1870
  %1872 = vrot.lane.b32.xlu0 %v1827, 80
  %v1873 = vpop.permute.xlu0 %1872
  %1874 = vrot.lane.b32.xlu0 %v1828, 80
  %v1875 = vpop.permute.xlu0 %1874
  %1876 = vrot.lane.b32.xlu0 %v1829, 80
  %v1877 = vpop.permute.xlu0 %1876
  %vm1894 = vcmask 786048
  %1895 = vst.msk [vmem:[#allocation5] sm:$0xff] %vm1894, %v1847
  %1896 = vst.msk [vmem:[#allocation5 + $0x10] sm:$0xff] %vm1894, %v1849
  %1897 = vst.msk [vmem:[#allocation5 + $0x20] sm:$0xff] %vm1894, %v1851
  %1898 = vst.msk [vmem:[#allocation5 + $0x30] sm:$0xff] %vm1894, %v1853
  %1899 = vst.msk [vmem:[#allocation5 + $0x40] sm:$0xff] %vm1894, %v1855
  %1900 = vst.msk [vmem:[#allocation5 + $0x50] sm:$0xff] %vm1894, %v1857
  %1901 = vst.msk [vmem:[#allocation5 + $0x60] sm:$0xff] %vm1894, %v1859
  %1902 = vst.msk [vmem:[#allocation5 + $0x70] sm:$0xff] %vm1894, %v1861
  %1903 = vst.msk [vmem:[#allocation5 + $0x80] sm:$0xff] %vm1894, %v1863
  %1904 = vst.msk [vmem:[#allocation5 + $0x90] sm:$0xff] %vm1894, %v1865
  %1905 = vst.msk [vmem:[#allocation5 + $0xa0] sm:$0xff] %vm1894, %v1867
  %1906 = vst.msk [vmem:[#allocation5 + $0xb0] sm:$0xff] %vm1894, %v1869
  %1907 = vst.msk [vmem:[#allocation5 + $0xc0] sm:$0xff] %vm1894, %v1871
  %1908 = vst.msk [vmem:[#allocation5 + $0xd0] sm:$0xff] %vm1894, %v1873
  %1909 = vst.msk [vmem:[#allocation5 + $0xe0] sm:$0xff] %vm1894, %v1875
  %1910 = vst.msk [vmem:[#allocation5 + $0xf0] sm:$0xff] %vm1894, %v1877
  %s1911 = scalar_lea.vmem [#allocation3], 32
  %v1912 = vld [vmem:[%s1911] sm:$0xff]
  %v1913 = vld [vmem:[%s1911 + $0x10] sm:$0xff]
  %v1914 = vld [vmem:[%s1911 + $0x20] sm:$0xff]
  %v1915 = vld [vmem:[%s1911 + $0x30] sm:$0xff]
  %v1916 = vld [vmem:[%s1911 + $0x40] sm:$0xff]
  %v1917 = vld [vmem:[%s1911 + $0x50] sm:$0xff]
  %v1918 = vld [vmem:[%s1911 + $0x60] sm:$0xff]
  %v1919 = vld [vmem:[%s1911 + $0x70] sm:$0xff]
  %v1920 = vld [vmem:[%s1911 + $0xa0] sm:$0xff]
  %v1921 = vld [vmem:[%s1911 + $0xb0] sm:$0xff]
  %v1922 = vld [vmem:[%s1911 + $0xc0] sm:$0xff]
  %v1923 = vld [vmem:[%s1911 + $0xd0] sm:$0xff]
  %v1924 = vld [vmem:[%s1911 + $0xe0] sm:$0xff]
  %v1925 = vld [vmem:[%s1911 + $0xf0] sm:$0xff]
  %v1926 = vld [vmem:[%s1911 + $0x100] sm:$0xff]
  %v1927 = vld [vmem:[%s1911 + $0x110] sm:$0xff]
  %1944 = vrot.lane.b32.xlu0 %v1912, 96
  %v1945 = vpop.permute.xlu0 %1944
  %1946 = vrot.lane.b32.xlu0 %v1913, 96
  %v1947 = vpop.permute.xlu0 %1946
  %1948 = vrot.lane.b32.xlu0 %v1914, 96
  %v1949 = vpop.permute.xlu0 %1948
  %1950 = vrot.lane.b32.xlu0 %v1915, 96
  %v1951 = vpop.permute.xlu0 %1950
  %1952 = vrot.lane.b32.xlu0 %v1916, 96
  %v1953 = vpop.permute.xlu0 %1952
  %1954 = vrot.lane.b32.xlu0 %v1917, 96
  %v1955 = vpop.permute.xlu0 %1954
  %1956 = vrot.lane.b32.xlu0 %v1918, 96
  %v1957 = vpop.permute.xlu0 %1956
  %1958 = vrot.lane.b32.xlu0 %v1919, 96
  %v1959 = vpop.permute.xlu0 %1958
  %1960 = vrot.lane.b32.xlu0 %v1920, 96
  %v1961 = vpop.permute.xlu0 %1960
  %1962 = vrot.lane.b32.xlu0 %v1921, 96
  %v1963 = vpop.permute.xlu0 %1962
  %1964 = vrot.lane.b32.xlu0 %v1922, 96
  %v1965 = vpop.permute.xlu0 %1964
  %1966 = vrot.lane.b32.xlu0 %v1923, 96
  %v1967 = vpop.permute.xlu0 %1966
  %1968 = vrot.lane.b32.xlu0 %v1924, 96
  %v1969 = vpop.permute.xlu0 %1968
  %1970 = vrot.lane.b32.xlu0 %v1925, 96
  %v1971 = vpop.permute.xlu0 %1970
  %1972 = vrot.lane.b32.xlu0 %v1926, 96
  %v1973 = vpop.permute.xlu0 %1972
  %1974 = vrot.lane.b32.xlu0 %v1927, 96
  %v1975 = vpop.permute.xlu0 %1974
  %vm1992 = vcmask 917248
  %1993 = vst.msk [vmem:[#allocation5] sm:$0xff] %vm1992, %v1945
  %1994 = vst.msk [vmem:[#allocation5 + $0x10] sm:$0xff] %vm1992, %v1947
  %1995 = vst.msk [vmem:[#allocation5 + $0x20] sm:$0xff] %vm1992, %v1949
  %1996 = vst.msk [vmem:[#allocation5 + $0x30] sm:$0xff] %vm1992, %v1951
  %1997 = vst.msk [vmem:[#allocation5 + $0x40] sm:$0xff] %vm1992, %v1953
  %1998 = vst.msk [vmem:[#allocation5 + $0x50] sm:$0xff] %vm1992, %v1955
  %1999 = vst.msk [vmem:[#allocation5 + $0x60] sm:$0xff] %vm1992, %v1957
  %2000 = vst.msk [vmem:[#allocation5 + $0x70] sm:$0xff] %vm1992, %v1959
  %2001 = vst.msk [vmem:[#allocation5 + $0x80] sm:$0xff] %vm1992, %v1961
  %2002 = vst.msk [vmem:[#allocation5 + $0x90] sm:$0xff] %vm1992, %v1963
  %2003 = vst.msk [vmem:[#allocation5 + $0xa0] sm:$0xff] %vm1992, %v1965
  %2004 = vst.msk [vmem:[#allocation5 + $0xb0] sm:$0xff] %vm1992, %v1967
  %2005 = vst.msk [vmem:[#allocation5 + $0xc0] sm:$0xff] %vm1992, %v1969
  %2006 = vst.msk [vmem:[#allocation5 + $0xd0] sm:$0xff] %vm1992, %v1971
  %2007 = vst.msk [vmem:[#allocation5 + $0xe0] sm:$0xff] %vm1992, %v1973
  %2008 = vst.msk [vmem:[#allocation5 + $0xf0] sm:$0xff] %vm1992, %v1975
  %v2009 = vld [vmem:[%s1911 + $0x1] sm:$0xff]
  %v2010 = vld [vmem:[%s1911 + $0x11] sm:$0xff]
  %v2011 = vld [vmem:[%s1911 + $0x21] sm:$0xff]
  %v2012 = vld [vmem:[%s1911 + $0x31] sm:$0xff]
  %v2013 = vld [vmem:[%s1911 + $0x41] sm:$0xff]
  %v2014 = vld [vmem:[%s1911 + $0x51] sm:$0xff]
  %v2015 = vld [vmem:[%s1911 + $0x61] sm:$0xff]
  %v2016 = vld [vmem:[%s1911 + $0x71] sm:$0xff]
  %v2017 = vld [vmem:[%s1911 + $0xa1] sm:$0xff]
  %v2018 = vld [vmem:[%s1911 + $0xb1] sm:$0xff]
  %v2019 = vld [vmem:[%s1911 + $0xc1] sm:$0xff]
  %v2020 = vld [vmem:[%s1911 + $0xd1] sm:$0xff]
  %v2021 = vld [vmem:[%s1911 + $0xe1] sm:$0xff]
  %v2022 = vld [vmem:[%s1911 + $0xf1] sm:$0xff]
  %v2023 = vld [vmem:[%s1911 + $0x101] sm:$0xff]
  %v2024 = vld [vmem:[%s1911 + $0x111] sm:$0xff]
  %2041 = vrot.lane.b32.xlu0 %v2009, 112
  %v2042 = vpop.permute.xlu0 %2041
  %2043 = vrot.lane.b32.xlu0 %v2010, 112
  %v2044 = vpop.permute.xlu0 %2043
  %2045 = vrot.lane.b32.xlu0 %v2011, 112
  %v2046 = vpop.permute.xlu0 %2045
  %2047 = vrot.lane.b32.xlu0 %v2012, 112
  %v2048 = vpop.permute.xlu0 %2047
  %2049 = vrot.lane.b32.xlu0 %v2013, 112
  %v2050 = vpop.permute.xlu0 %2049
  %2051 = vrot.lane.b32.xlu0 %v2014, 112
  %v2052 = vpop.permute.xlu0 %2051
  %2053 = vrot.lane.b32.xlu0 %v2015, 112
  %v2054 = vpop.permute.xlu0 %2053
  %2055 = vrot.lane.b32.xlu0 %v2016, 112
  %v2056 = vpop.permute.xlu0 %2055
  %2057 = vrot.lane.b32.xlu0 %v2017, 112
  %v2058 = vpop.permute.xlu0 %2057
  %2059 = vrot.lane.b32.xlu0 %v2018, 112
  %v2060 = vpop.permute.xlu0 %2059
  %2061 = vrot.lane.b32.xlu0 %v2019, 112
  %v2062 = vpop.permute.xlu0 %2061
  %2063 = vrot.lane.b32.xlu0 %v2020, 112
  %v2064 = vpop.permute.xlu0 %2063
  %2065 = vrot.lane.b32.xlu0 %v2021, 112
  %v2066 = vpop.permute.xlu0 %2065
  %2067 = vrot.lane.b32.xlu0 %v2022, 112
  %v2068 = vpop.permute.xlu0 %2067
  %2069 = vrot.lane.b32.xlu0 %v2023, 112
  %v2070 = vpop.permute.xlu0 %2069
  %2071 = vrot.lane.b32.xlu0 %v2024, 112
  %v2072 = vpop.permute.xlu0 %2071
  %vm2089 = vcmask 1048448
  %2090 = vst.msk [vmem:[#allocation5] sm:$0xff] %vm2089, %v2042
  %2091 = vst.msk [vmem:[#allocation5 + $0x10] sm:$0xff] %vm2089, %v2044
  %2092 = vst.msk [vmem:[#allocation5 + $0x20] sm:$0xff] %vm2089, %v2046
  %2093 = vst.msk [vmem:[#allocation5 + $0x30] sm:$0xff] %vm2089, %v2048
  %2094 = vst.msk [vmem:[#allocation5 + $0x40] sm:$0xff] %vm2089, %v2050
  %2095 = vst.msk [vmem:[#allocation5 + $0x50] sm:$0xff] %vm2089, %v2052
  %2096 = vst.msk [vmem:[#allocation5 + $0x60] sm:$0xff] %vm2089, %v2054
  %2097 = vst.msk [vmem:[#allocation5 + $0x70] sm:$0xff] %vm2089, %v2056
  %2098 = vst.msk [vmem:[#allocation5 + $0x80] sm:$0xff] %vm2089, %v2058
  %2099 = vst.msk [vmem:[#allocation5 + $0x90] sm:$0xff] %vm2089, %v2060
  %2100 = vst.msk [vmem:[#allocation5 + $0xa0] sm:$0xff] %vm2089, %v2062
  %2101 = vst.msk [vmem:[#allocation5 + $0xb0] sm:$0xff] %vm2089, %v2064
  %2102 = vst.msk [vmem:[#allocation5 + $0xc0] sm:$0xff] %vm2089, %v2066
  %2103 = vst.msk [vmem:[#allocation5 + $0xd0] sm:$0xff] %vm2089, %v2068
  %2104 = vst.msk [vmem:[#allocation5 + $0xe0] sm:$0xff] %vm2089, %v2070
  %2105 = vst.msk [vmem:[#allocation5 + $0xf0] sm:$0xff] %vm2089, %v2072
  %v2106 = vld [vmem:[%s1911 + $0x2] sm:$0xff]
  %v2107 = vld [vmem:[%s1911 + $0x12] sm:$0xff]
  %v2108 = vld [vmem:[%s1911 + $0x22] sm:$0xff]
  %v2109 = vld [vmem:[%s1911 + $0x32] sm:$0xff]
  %v2110 = vld [vmem:[%s1911 + $0x42] sm:$0xff]
  %v2111 = vld [vmem:[%s1911 + $0x52] sm:$0xff]
  %v2112 = vld [vmem:[%s1911 + $0x62] sm:$0xff]
  %v2113 = vld [vmem:[%s1911 + $0x72] sm:$0xff]
  %v2114 = vld [vmem:[%s1911 + $0xa2] sm:$0xff]
  %v2115 = vld [vmem:[%s1911 + $0xb2] sm:$0xff]
  %v2116 = vld [vmem:[%s1911 + $0xc2] sm:$0xff]
  %v2117 = vld [vmem:[%s1911 + $0xd2] sm:$0xff]
  %v2118 = vld [vmem:[%s1911 + $0xe2] sm:$0xff]
  %v2119 = vld [vmem:[%s1911 + $0xf2] sm:$0xff]
  %v2120 = vld [vmem:[%s1911 + $0x102] sm:$0xff]
  %v2121 = vld [vmem:[%s1911 + $0x112] sm:$0xff]
  %2122 = vst.msk [vmem:[#allocation5 + $0x8] sm:$0xff] %vm1150, %v2106
  %2123 = vst.msk [vmem:[#allocation5 + $0x18] sm:$0xff] %vm1150, %v2107
  %2124 = vst.msk [vmem:[#allocation5 + $0x28] sm:$0xff] %vm1150, %v2108
  %2125 = vst.msk [vmem:[#allocation5 + $0x38] sm:$0xff] %vm1150, %v2109
  %2126 = vst.msk [vmem:[#allocation5 + $0x48] sm:$0xff] %vm1150, %v2110
  %2127 = vst.msk [vmem:[#allocation5 + $0x58] sm:$0xff] %vm1150, %v2111
  %2128 = vst.msk [vmem:[#allocation5 + $0x68] sm:$0xff] %vm1150, %v2112
  %2129 = vst.msk [vmem:[#allocation5 + $0x78] sm:$0xff] %vm1150, %v2113
  %2130 = vst.msk [vmem:[#allocation5 + $0x88] sm:$0xff] %vm1150, %v2114
  %2131 = vst.msk [vmem:[#allocation5 + $0x98] sm:$0xff] %vm1150, %v2115
  %2132 = vst.msk [vmem:[#allocation5 + $0xa8] sm:$0xff] %vm1150, %v2116
  %2133 = vst.msk [vmem:[#allocation5 + $0xb8] sm:$0xff] %vm1150, %v2117
  %2134 = vst.msk [vmem:[#allocation5 + $0xc8] sm:$0xff] %vm1150, %v2118
  %2135 = vst.msk [vmem:[#allocation5 + $0xd8] sm:$0xff] %vm1150, %v2119
  %2136 = vst.msk [vmem:[#allocation5 + $0xe8] sm:$0xff] %vm1150, %v2120
  %2137 = vst.msk [vmem:[#allocation5 + $0xf8] sm:$0xff] %vm1150, %v2121
  %v2138 = vld [vmem:[#allocation5] sm:$0xff]
  %v2139 = vld [vmem:[#allocation5 + $0x8] sm:$0xff]
  %v2140 = vld [vmem:[#allocation5 + $0x10] sm:$0xff]
  %v2141 = vld [vmem:[#allocation5 + $0x18] sm:$0xff]
  %v2142 = vld [vmem:[#allocation5 + $0x20] sm:$0xff]
  %v2143 = vld [vmem:[#allocation5 + $0x28] sm:$0xff]
  %v2144 = vld [vmem:[#allocation5 + $0x30] sm:$0xff]
  %v2145 = vld [vmem:[#allocation5 + $0x38] sm:$0xff]
  %v2146 = vld [vmem:[#allocation5 + $0x40] sm:$0xff]
  %v2147 = vld [vmem:[#allocation5 + $0x48] sm:$0xff]
  %v2148 = vld [vmem:[#allocation5 + $0x50] sm:$0xff]
  %v2149 = vld [vmem:[#allocation5 + $0x58] sm:$0xff]
  %v2150 = vld [vmem:[#allocation5 + $0x60] sm:$0xff]
  %v2151 = vld [vmem:[#allocation5 + $0x68] sm:$0xff]
  %v2152 = vld [vmem:[#allocation5 + $0x70] sm:$0xff]
  %v2153 = vld [vmem:[#allocation5 + $0x78] sm:$0xff]
  %v2154 = vld [vmem:[#allocation5 + $0x80] sm:$0xff]
  %v2155 = vld [vmem:[#allocation5 + $0x88] sm:$0xff]
  %v2156 = vld [vmem:[#allocation5 + $0x90] sm:$0xff]
  %v2157 = vld [vmem:[#allocation5 + $0x98] sm:$0xff]
  %v2158 = vld [vmem:[#allocation5 + $0xa0] sm:$0xff]
  %v2159 = vld [vmem:[#allocation5 + $0xa8] sm:$0xff]
  %v2160 = vld [vmem:[#allocation5 + $0xb0] sm:$0xff]
  %v2161 = vld [vmem:[#allocation5 + $0xb8] sm:$0xff]
  %v2162 = vld [vmem:[#allocation5 + $0xc0] sm:$0xff]
  %v2163 = vld [vmem:[#allocation5 + $0xc8] sm:$0xff]
  %v2164 = vld [vmem:[#allocation5 + $0xd0] sm:$0xff]
  %v2165 = vld [vmem:[#allocation5 + $0xd8] sm:$0xff]
  %v2166 = vld [vmem:[#allocation5 + $0xe0] sm:$0xff]
  %v2167 = vld [vmem:[#allocation5 + $0xe8] sm:$0xff]
  %v2168 = vld [vmem:[#allocation5 + $0xf0] sm:$0xff]
  %v2169 = vld [vmem:[#allocation5 + $0xf8] sm:$0xff]
  %v2170 = vld [vmem:[%s4] sm:$0xff]
  %v2171 = vld [vmem:[%s4 + $0x8] sm:$0xff]
  %v2172 = vld [vmem:[%s4 + $0x10] sm:$0xff]
  %v2173 = vld [vmem:[%s4 + $0x18] sm:$0xff]
  %v2174 = vld [vmem:[%s4 + $0x20] sm:$0xff]
  %v2175 = vld [vmem:[%s4 + $0x28] sm:$0xff]
  %v2176 = vld [vmem:[%s4 + $0x30] sm:$0xff]
  %v2177 = vld [vmem:[%s4 + $0x38] sm:$0xff]
  %v2178 = vld [vmem:[%s4 + $0x40] sm:$0xff]
  %v2179 = vld [vmem:[%s4 + $0x48] sm:$0xff]
  %v2180 = vld [vmem:[%s4 + $0x50] sm:$0xff]
  %v2181 = vld [vmem:[%s4 + $0x58] sm:$0xff]
  %v2182 = vld [vmem:[%s4 + $0x60] sm:$0xff]
  %v2183 = vld [vmem:[%s4 + $0x68] sm:$0xff]
  %v2184 = vld [vmem:[%s4 + $0x70] sm:$0xff]
  %v2185 = vld [vmem:[%s4 + $0x78] sm:$0xff]
  %v2186 = vld [vmem:[%s4 + $0x80] sm:$0xff]
  %v2187 = vld [vmem:[%s4 + $0x88] sm:$0xff]
  %v2189 = vsel %vm1150, %v2139, 0
  %v2192 = vsel %vm1150, %v2141, 0
  %v2195 = vsel %vm1150, %v2143, 0
  %v2198 = vsel %vm1150, %v2145, 0
  %v2201 = vsel %vm1150, %v2147, 0
  %v2204 = vsel %vm1150, %v2149, 0
  %v2207 = vsel %vm1150, %v2151, 0
  %v2210 = vsel %vm1150, %v2153, 0
  %v2213 = vsel %vm1150, %v2155, 0
  %v2216 = vsel %vm1150, %v2157, 0
  %v2219 = vsel %vm1150, %v2159, 0
  %v2222 = vsel %vm1150, %v2161, 0
  %v2225 = vsel %vm1150, %v2163, 0
  %v2228 = vsel %vm1150, %v2165, 0
  %v2231 = vsel %vm1150, %v2167, 0
  %v2234 = vsel %vm1150, %v2169, 0
  %2236 = vmatpush.msra.mxu0 %v2185
  %2237 = vmatpush.msra.mxu0 %v2184
  %2238 = vmatpush.msra.mxu0 %v2183
  %2239 = vmatpush.msra.mxu0 %v2182
  %2240 = vmatpush.msra.mxu0 %v2181
  %2241 = vmatpush.msra.mxu0 %v2180
  %2242 = vmatpush.msra.mxu0 %v2179
  %2243 = vmatpush.msra.mxu0 %v2178
  %2244 = vmatpush.msra.mxu0 %v2177
  %2245 = vmatpush.msra.mxu0 %v2176
  %2246 = vmatpush.msra.mxu0 %v2175
  %2247 = vmatpush.msra.mxu0 %v2174
  %2248 = vmatpush.msra.mxu0 %v2173
  %2249 = vmatpush.msra.mxu0 %v2172
  %2250 = vmatpush.msra.mxu0 %v2171
  %2251 = vmatpush.msra.mxu0 %v2170
  %2252 = vmatmul.f32.gmra.mxu0 %v2138
  %v2253 = vpop.f32.mrf.mxu0
  %v2254 = vadd.f32 0.0, %v2253
  %2255 = vmatmul.f32.gmra.mxu0 %v2140
  %v2256 = vpop.f32.mrf.mxu0
  %v2257 = vadd.f32 0.0, %v2256
  %2258 = vmatmul.f32.gmra.mxu0 %v2142
  %v2259 = vpop.f32.mrf.mxu0
  %v2260 = vadd.f32 0.0, %v2259
  %2261 = vmatmul.f32.gmra.mxu0 %v2144
  %v2262 = vpop.f32.mrf.mxu0
  %v2263 = vadd.f32 0.0, %v2262
  %2264 = vmatmul.f32.gmra.mxu0 %v2146
  %v2265 = vpop.f32.mrf.mxu0
  %v2266 = vadd.f32 0.0, %v2265
  %2267 = vmatmul.f32.gmra.mxu0 %v2148
  %v2268 = vpop.f32.mrf.mxu0
  %v2269 = vadd.f32 0.0, %v2268
  %2270 = vmatmul.f32.gmra.mxu0 %v2150
  %v2271 = vpop.f32.mrf.mxu0
  %v2272 = vadd.f32 0.0, %v2271
  %2273 = vmatmul.f32.gmra.mxu0 %v2152
  %v2274 = vpop.f32.mrf.mxu0
  %v2275 = vadd.f32 0.0, %v2274
  %2276 = vmatmul.f32.gmra.mxu0 %v2154
  %v2277 = vpop.f32.mrf.mxu0
  %v2278 = vadd.f32 0.0, %v2277
  %2279 = vmatmul.f32.gmra.mxu0 %v2156
  %v2280 = vpop.f32.mrf.mxu0
  %v2281 = vadd.f32 0.0, %v2280
  %2282 = vmatmul.f32.gmra.mxu0 %v2158
  %v2283 = vpop.f32.mrf.mxu0
  %v2284 = vadd.f32 0.0, %v2283
  %2285 = vmatmul.f32.gmra.mxu0 %v2160
  %v2286 = vpop.f32.mrf.mxu0
  %v2287 = vadd.f32 0.0, %v2286
  %2288 = vmatmul.f32.gmra.mxu0 %v2162
  %v2289 = vpop.f32.mrf.mxu0
  %v2290 = vadd.f32 0.0, %v2289
  %2291 = vmatmul.f32.gmra.mxu0 %v2164
  %v2292 = vpop.f32.mrf.mxu0
  %v2293 = vadd.f32 0.0, %v2292
  %2294 = vmatmul.f32.gmra.mxu0 %v2166
  %v2295 = vpop.f32.mrf.mxu0
  %v2296 = vadd.f32 0.0, %v2295
  %2297 = vmatmul.f32.gmra.mxu0 %v2168
  %v2298 = vpop.f32.mrf.mxu0
  %v2299 = vadd.f32 0.0, %v2298
  %2300 = vdwg.mxu0
  %2301 = vmatpush.msra.mxu0 0.0
  %2302 = vmatpush.msra.mxu0 0.0
  %2303 = vmatpush.msra.mxu0 0.0
  %2304 = vmatpush.msra.mxu0 0.0
  %2305 = vmatpush.msra.mxu0 0.0
  %2306 = vmatpush.msra.mxu0 0.0
  %2307 = vmatpush.msra.mxu0 0.0
  %2308 = vmatpush.msra.mxu0 0.0
  %2309 = vmatpush.msra.mxu0 0.0
  %2310 = vmatpush.msra.mxu0 0.0
  %2311 = vmatpush.msra.mxu0 0.0
  %2312 = vmatpush.msra.mxu0 0.0
  %2313 = vmatpush.msra.mxu0 0.0
  %2314 = vmatpush.msra.mxu0 0.0
  %2315 = vmatpush.msra.mxu0 %v2187
  %2316 = vmatpush.msra.mxu0 %v2186
  %2317 = vmatmul.f32.gmra.mxu0 %v2189
  %v2318 = vpop.f32.mrf.mxu0
  %v2319 = vadd.f32 %v2254, %v2318
  %2320 = vmatmul.f32.gmra.mxu0 %v2192
  %v2321 = vpop.f32.mrf.mxu0
  %v2322 = vadd.f32 %v2257, %v2321
  %2323 = vmatmul.f32.gmra.mxu0 %v2195
  %v2324 = vpop.f32.mrf.mxu0
  %v2325 = vadd.f32 %v2260, %v2324
  %2326 = vmatmul.f32.gmra.mxu0 %v2198
  %v2327 = vpop.f32.mrf.mxu0
  %v2328 = vadd.f32 %v2263, %v2327
  %2329 = vmatmul.f32.gmra.mxu0 %v2201
  %v2330 = vpop.f32.mrf.mxu0
  %v2331 = vadd.f32 %v2266, %v2330
  %2332 = vmatmul.f32.gmra.mxu0 %v2204
  %v2333 = vpop.f32.mrf.mxu0
  %v2334 = vadd.f32 %v2269, %v2333
  %2335 = vmatmul.f32.gmra.mxu0 %v2207
  %v2336 = vpop.f32.mrf.mxu0
  %v2337 = vadd.f32 %v2272, %v2336
  %2338 = vmatmul.f32.gmra.mxu0 %v2210
  %v2339 = vpop.f32.mrf.mxu0
  %v2340 = vadd.f32 %v2275, %v2339
  %2341 = vmatmul.f32.gmra.mxu0 %v2213
  %v2342 = vpop.f32.mrf.mxu0
  %v2343 = vadd.f32 %v2278, %v2342
  %2344 = vmatmul.f32.gmra.mxu0 %v2216
  %v2345 = vpop.f32.mrf.mxu0
  %v2346 = vadd.f32 %v2281, %v2345
  %2347 = vmatmul.f32.gmra.mxu0 %v2219
  %v2348 = vpop.f32.mrf.mxu0
  %v2349 = vadd.f32 %v2284, %v2348
  %2350 = vmatmul.f32.gmra.mxu0 %v2222
  %v2351 = vpop.f32.mrf.mxu0
  %v2352 = vadd.f32 %v2287, %v2351
  %2353 = vmatmul.f32.gmra.mxu0 %v2225
  %v2354 = vpop.f32.mrf.mxu0
  %v2355 = vadd.f32 %v2290, %v2354
  %2356 = vmatmul.f32.gmra.mxu0 %v2228
  %v2357 = vpop.f32.mrf.mxu0
  %v2358 = vadd.f32 %v2293, %v2357
  %2359 = vmatmul.f32.gmra.mxu0 %v2231
  %v2360 = vpop.f32.mrf.mxu0
  %v2361 = vadd.f32 %v2296, %v2360
  %2362 = vmatmul.f32.gmra.mxu0 %v2234
  %v2363 = vpop.f32.mrf.mxu0
  %v2364 = vadd.f32 %v2299, %v2363
  %2365 = vdwg.mxu0
  %v2366 = vsel %vm1150, %v2319, 0.0
  %v2367 = vsel %vm1150, %v2322, 0.0
  %v2368 = vadd.f32 %v2366, %v2367
  %v2369 = vsel %vm1150, %v2325, 0.0
  %v2370 = vadd.f32 %v2368, %v2369
  %v2371 = vsel %vm1150, %v2328, 0.0
  %v2372 = vadd.f32 %v2370, %v2371
  %v2373 = vsel %vm1150, %v2331, 0.0
  %v2374 = vadd.f32 %v2372, %v2373
  %v2375 = vsel %vm1150, %v2334, 0.0
  %v2376 = vadd.f32 %v2374, %v2375
  %v2377 = vsel %vm1150, %v2337, 0.0
  %v2378 = vadd.f32 %v2376, %v2377
  %v2379 = vsel %vm1150, %v2340, 0.0
  %v2380 = vadd.f32 %v2378, %v2379
  %v2381 = vsel %vm1150, %v2343, 0.0
  %v2382 = vadd.f32 %v2380, %v2381
  %v2383 = vsel %vm1150, %v2346, 0.0
  %v2384 = vadd.f32 %v2382, %v2383
  %v2385 = vsel %vm1150, %v2349, 0.0
  %v2386 = vadd.f32 %v2384, %v2385
  %v2387 = vsel %vm1150, %v2352, 0.0
  %v2388 = vadd.f32 %v2386, %v2387
  %v2389 = vsel %vm1150, %v2355, 0.0
  %v2390 = vadd.f32 %v2388, %v2389
  %v2391 = vsel %vm1150, %v2358, 0.0
  %v2392 = vadd.f32 %v2390, %v2391
  %v2393 = vsel %vm1150, %v2361, 0.0
  %v2394 = vadd.f32 %v2392, %v2393
  %v2395 = vsel %vm1150, %v2364, 0.0
  %v2396 = vadd.f32 %v2394, %v2395
  %v2397 = vrot.slane %v2396, 4
  %v2398 = vadd.f32 %v2396, %v2397
  %v2399 = vrot.slane %v2398, 2
  %v2400 = vadd.f32 %v2398, %v2399
  %v2401 = vrot.slane %v2400, 1
  %v2402 = vadd.f32 %v2400, %v2401
  %v2403 = vmul.f32 %v2402, %v1194
  %v2404 = vsub.f32 %v2319, %v2403
  %v2405 = vsub.f32 %v2322, %v2403
  %v2406 = vsub.f32 %v2325, %v2403
  %v2407 = vsub.f32 %v2328, %v2403
  %v2408 = vsub.f32 %v2331, %v2403
  %v2409 = vsub.f32 %v2334, %v2403
  %v2410 = vsub.f32 %v2337, %v2403
  %v2411 = vsub.f32 %v2340, %v2403
  %v2412 = vsub.f32 %v2343, %v2403
  %v2413 = vsub.f32 %v2346, %v2403
  %v2414 = vsub.f32 %v2349, %v2403
  %v2415 = vsub.f32 %v2352, %v2403
  %v2416 = vsub.f32 %v2355, %v2403
  %v2417 = vsub.f32 %v2358, %v2403
  %v2418 = vsub.f32 %v2361, %v2403
  %v2419 = vsub.f32 %v2364, %v2403
  %v2420 = vmul.f32 %v2404, %v2404
  %v2421 = vmul.f32 %v2405, %v2405
  %v2422 = vmul.f32 %v2406, %v2406
  %v2423 = vmul.f32 %v2407, %v2407
  %v2424 = vmul.f32 %v2408, %v2408
  %v2425 = vmul.f32 %v2409, %v2409
  %v2426 = vmul.f32 %v2410, %v2410
  %v2427 = vmul.f32 %v2411, %v2411
  %v2428 = vmul.f32 %v2412, %v2412
  %v2429 = vmul.f32 %v2413, %v2413
  %v2430 = vmul.f32 %v2414, %v2414
  %v2431 = vmul.f32 %v2415, %v2415
  %v2432 = vmul.f32 %v2416, %v2416
  %v2433 = vmul.f32 %v2417, %v2417
  %v2434 = vmul.f32 %v2418, %v2418
  %v2435 = vmul.f32 %v2419, %v2419
  %v2436 = vsel %vm1150, %v2420, 0.0
  %v2437 = vsel %vm1150, %v2421, 0.0
  %v2438 = vadd.f32 %v2436, %v2437
  %v2439 = vsel %vm1150, %v2422, 0.0
  %v2440 = vadd.f32 %v2438, %v2439
  %v2441 = vsel %vm1150, %v2423, 0.0
  %v2442 = vadd.f32 %v2440, %v2441
  %v2443 = vsel %vm1150, %v2424, 0.0
  %v2444 = vadd.f32 %v2442, %v2443
  %v2445 = vsel %vm1150, %v2425, 0.0
  %v2446 = vadd.f32 %v2444, %v2445
  %v2447 = vsel %vm1150, %v2426, 0.0
  %v2448 = vadd.f32 %v2446, %v2447
  %v2449 = vsel %vm1150, %v2427, 0.0
  %v2450 = vadd.f32 %v2448, %v2449
  %v2451 = vsel %vm1150, %v2428, 0.0
  %v2452 = vadd.f32 %v2450, %v2451
  %v2453 = vsel %vm1150, %v2429, 0.0
  %v2454 = vadd.f32 %v2452, %v2453
  %v2455 = vsel %vm1150, %v2430, 0.0
  %v2456 = vadd.f32 %v2454, %v2455
  %v2457 = vsel %vm1150, %v2431, 0.0
  %v2458 = vadd.f32 %v2456, %v2457
  %v2459 = vsel %vm1150, %v2432, 0.0
  %v2460 = vadd.f32 %v2458, %v2459
  %v2461 = vsel %vm1150, %v2433, 0.0
  %v2462 = vadd.f32 %v2460, %v2461
  %v2463 = vsel %vm1150, %v2434, 0.0
  %v2464 = vadd.f32 %v2462, %v2463
  %v2465 = vsel %vm1150, %v2435, 0.0
  %v2466 = vadd.f32 %v2464, %v2465
  %v2467 = vrot.slane %v2466, 4
  %v2468 = vadd.f32 %v2466, %v2467
  %v2469 = vrot.slane %v2468, 2
  %v2470 = vadd.f32 %v2468, %v2469
  %v2471 = vrot.slane %v2470, 1
  %v2472 = vadd.f32 %v2470, %v2471
  %v2473 = vmul.f32 %v2472, %v1194
  %v2474 = vld [vmem:[%s5] sm:$0x1]
  %v2475 = vadd.f32 %v2473, 1e-05
  %v2476 = vrsqrt.pop %v2475
  %v2477 = vmul.f32 %v2476, %v2475
  %v2478 = vmul.f32 %v2477, %v2476
  %v2479 = vmul.f32 0.5, %v2478
  %v2480 = vsub.f32 1.5, %v2479
  %v2481 = vmul.f32 %v2476, %v2480
  %vm2482 = vweird.f32 %v2475
  %vm2483 = vweird.f32 %v2476
  %vm2484 = vmor %vm2482, %vm2483
  %v2485 = vsel %vm2484, %v2476, %v2481
  %v2486 = vmul.f32 %v2474, %v2485
  %v2488 = vperm.slane %v2486, 0
  %v2490 = vmul.f32 %v2404, %v2488
  %v2491 = vmul.f32 %v2405, %v2488
  %v2492 = vmul.f32 %v2406, %v2488
  %v2493 = vmul.f32 %v2407, %v2488
  %v2494 = vmul.f32 %v2408, %v2488
  %v2495 = vmul.f32 %v2409, %v2488
  %v2496 = vmul.f32 %v2410, %v2488
  %v2497 = vmul.f32 %v2411, %v2488
  %v2498 = vmul.f32 %v2412, %v2488
  %v2499 = vmul.f32 %v2413, %v2488
  %v2500 = vmul.f32 %v2414, %v2488
  %v2501 = vmul.f32 %v2415, %v2488
  %v2502 = vmul.f32 %v2416, %v2488
  %v2503 = vmul.f32 %v2417, %v2488
  %v2504 = vmul.f32 %v2418, %v2488
  %v2505 = vmul.f32 %v2419, %v2488
  %v2506 = vld [vmem:[%s6] sm:$0x1]
  %v2508 = vperm.slane %v2506, 0
  %v2510 = vadd.f32 %v2490, %v2508
  %v2511 = vadd.f32 %v2491, %v2508
  %v2512 = vadd.f32 %v2492, %v2508
  %v2513 = vadd.f32 %v2493, %v2508
  %v2514 = vadd.f32 %v2494, %v2508
  %v2515 = vadd.f32 %v2495, %v2508
  %v2516 = vadd.f32 %v2496, %v2508
  %v2517 = vadd.f32 %v2497, %v2508
  %v2518 = vadd.f32 %v2498, %v2508
  %v2519 = vadd.f32 %v2499, %v2508
  %v2520 = vadd.f32 %v2500, %v2508
  %v2521 = vadd.f32 %v2501, %v2508
  %v2522 = vadd.f32 %v2502, %v2508
  %v2523 = vadd.f32 %v2503, %v2508
  %v2524 = vadd.f32 %v2504, %v2508
  %v2525 = vadd.f32 %v2505, %v2508
  %v2526 = vmax.f32 %v2510, 0.0
  %v2527 = vmax.f32 %v2511, 0.0
  %v2528 = vmax.f32 %v2512, 0.0
  %v2529 = vmax.f32 %v2513, 0.0
  %v2530 = vmax.f32 %v2514, 0.0
  %v2531 = vmax.f32 %v2515, 0.0
  %v2532 = vmax.f32 %v2516, 0.0
  %v2533 = vmax.f32 %v2517, 0.0
  %v2534 = vmax.f32 %v2518, 0.0
  %v2535 = vmax.f32 %v2519, 0.0
  %v2536 = vmax.f32 %v2520, 0.0
  %v2537 = vmax.f32 %v2521, 0.0
  %v2538 = vmax.f32 %v2522, 0.0
  %v2539 = vmax.f32 %v2523, 0.0
  %v2540 = vmax.f32 %v2524, 0.0
  %v2541 = vmax.f32 %v2525, 0.0
  %2542 = vst.msk [vmem:[%s7] sm:$0xff] %vm1150, %v2526
  %2543 = vst.msk [vmem:[%s7 + $0x8] sm:$0xff] %vm1150, %v2527
  %2544 = vst.msk [vmem:[%s7 + $0x10] sm:$0xff] %vm1150, %v2528
  %2545 = vst.msk [vmem:[%s7 + $0x18] sm:$0xff] %vm1150, %v2529
  %2546 = vst.msk [vmem:[%s7 + $0x20] sm:$0xff] %vm1150, %v2530
  %2547 = vst.msk [vmem:[%s7 + $0x28] sm:$0xff] %vm1150, %v2531
  %2548 = vst.msk [vmem:[%s7 + $0x30] sm:$0xff] %vm1150, %v2532
  %2549 = vst.msk [vmem:[%s7 + $0x38] sm:$0xff] %vm1150, %v2533
  %2550 = vst.msk [vmem:[%s7 + $0x40] sm:$0xff] %vm1150, %v2534
  %2551 = vst.msk [vmem:[%s7 + $0x48] sm:$0xff] %vm1150, %v2535
  %2552 = vst.msk [vmem:[%s7 + $0x50] sm:$0xff] %vm1150, %v2536
  %2553 = vst.msk [vmem:[%s7 + $0x58] sm:$0xff] %vm1150, %v2537
  %2554 = vst.msk [vmem:[%s7 + $0x60] sm:$0xff] %vm1150, %v2538
  %2555 = vst.msk [vmem:[%s7 + $0x68] sm:$0xff] %vm1150, %v2539
  %2556 = vst.msk [vmem:[%s7 + $0x70] sm:$0xff] %vm1150, %v2540
  %2557 = vst.msk [vmem:[%s7 + $0x78] sm:$0xff] %vm1150, %v2541
  // Predicated region
  $region30: #{tpu_custom_call.1} parent=0 // pred_check
    _
  $region31: #{tpu_custom_call.1} parent=0 // pred_check_branch
    %2559 = sbr.rel (0) target = $region33
  $region32: #{tpu_custom_call.1} parent=0 // pred_region
    _
  $region33: #{tpu_custom_call.1} parent=0 // pred_fallthru
    _
  // Predicated region
  $region34: #{tpu_custom_call.1} parent=0 // pred_check
    _
  $region35: #{tpu_custom_call.1} parent=0 // pred_check_branch
    %2561 = sbr.rel (0) target = $region37
  $region36: #{tpu_custom_call.1} parent=0 // pred_region
    _
  $region37: #{tpu_custom_call.1} parent=0 // pred_fallthru
    _

</llo_original>
